<compile_context>
chip_gen: v6e
topology: v6e:2x2x1
jax: 0.10.0
libtpu: 0.0.40
codegen_flags: <defaults>
</compile_context>

<pallas_src>
import functools
import math

import jax
import jax.numpy as jnp
from jax.experimental import pallas as pl
from jax.experimental.pallas import tpu as pltpu


def _cross_attention_kernel(x3q_ref, x3_ref, x2_ref, w_ref, b_ref, o_ref,
                            kc_ref, vc_ref, *, num_heads, kt_layout):
    """One (batch, query-tile) grid step.

    x3q_ref: (1, Tq, hidden) bf16   query-source tile (padded seq axis)
    x3_ref : (1, S, hidden)  bf16   full K source for this batch
    x2_ref : (1, S, hidden)  bf16   full V source for this batch
    w_ref  : (4, hidden, hidden) bf16  [Wq*scale | Wk | Wv | Wo], (in, out)
    b_ref  : (4, hidden) f32           [bq*scale | bk | bv | bo]
    kc_ref : persistent bf16 K cache, (hidden, S) if kt_layout else (S, hidden)
    vc_ref : persistent bf16 V cache, (S, hidden)
    """
    qi = pl.program_id(1)
    q_tile = x3q_ref.shape[1]
    S = x3_ref.shape[1]
    hidden = x3_ref.shape[2]
    dh = hidden // num_heads

    # ---- K / V projections: once per batch (qi == 0), cached bf16 in VMEM ----
    @pl.when(qi == 0)
    def _():
        k = jnp.dot(x3_ref[0], w_ref[1],
                    preferred_element_type=jnp.float32) + b_ref[1:2, :]
        v = jnp.dot(x2_ref[0], w_ref[2],
                    preferred_element_type=jnp.float32) + b_ref[2:3, :]
        if kt_layout:
            # Single f32 transpose per batch; per-head QK^T then consumes
            # (dh, S) directly (no per-tile XLU transposes).
            kc_ref[...] = jnp.transpose(k).astype(jnp.bfloat16)
        else:
            kc_ref[...] = k.astype(jnp.bfloat16)
        vc_ref[...] = v.astype(jnp.bfloat16)

    # ---- Q projection for this query tile (scale pre-folded into Wq/bq),
    #      cast to bf16 once. ----
    q = jnp.dot(x3q_ref[0], w_ref[0],
                preferred_element_type=jnp.float32) + b_ref[0:1, :]
    q = q.astype(jnp.bfloat16)

    # ---- Per-head attention; per-head Wo accumulation (no lane concat). ----
    # TODO(synk): attention/proj dropout are identity here (inference).
    # TODO(synk): for num_heads >= 16 run this loop via lax.fori_loop over a
    #             stacked scratch to bound live (Tq, S) score tiles.
    acc = jnp.zeros((q_tile, hidden), jnp.float32)
    for h in range(num_heads):
        lo = h * dh
        qh = q[:, lo:lo + dh]                                     # (Tq, dh) bf16
        if kt_layout:
            s = jnp.dot(qh, kc_ref[lo:lo + dh, :],
                        preferred_element_type=jnp.float32)       # (Tq, S) f32
        else:
            s = jnp.einsum("qd,kd->qk", qh, kc_ref[:, lo:lo + dh],
                           preferred_element_type=jnp.float32)    # (Tq, S) f32
        m = jnp.max(s, axis=-1, keepdims=True)
        e = jnp.exp(s - m)
        p = e * pl.reciprocal(jnp.sum(e, axis=-1, keepdims=True), approx=True)
        ctx_h = jnp.dot(p.astype(jnp.bfloat16), vc_ref[:, lo:lo + dh],
                        preferred_element_type=jnp.float32)       # (Tq, dh) f32
        acc = acc + jnp.dot(ctx_h.astype(jnp.bfloat16),
                            w_ref[3, lo:lo + dh, :],
                            preferred_element_type=jnp.float32)   # (Tq, hidden)

    o_ref[0] = (acc + b_ref[3:4, :]).astype(o_ref.dtype)


def _choose_q_tile(S):
    """Return (q_tile, padded_S).

    Small S: a single tile (no padding).  Large S: 512 / 256 if they divide S
    (MXU-aligned on v6e/v7x, 2x128 on v5e); otherwise pad the query axis up to
    a multiple of 256.  Never returns pathological tiny tiles.
    """
    if S <= 512:
        return S, S
    for t in (512, 256):
        if S % t == 0:
            return t, S
    t = 256
    return t, ((S + t - 1) // t) * t


def _vmem_limit_bytes(S, q_tile, hidden):
    """Shape-derived VMEM budget: single-buffered weights, double-buffered
    input/output blocks, persistent bf16 KV cache, f32 transients + headroom."""
    bf16, f32 = 2, 4
    weights = 4 * hidden * hidden * bf16 + 4 * hidden * f32
    inputs = 2 * (2 * S * hidden + q_tile * hidden) * bf16
    output = 2 * q_tile * hidden * f32
    kv_cache = 2 * S * hidden * bf16
    transients = (3 * S * hidden * f32          # f32 K/V (+ transpose dst)
                  + 2 * q_tile * S * f32        # score tiles
                  + 4 * q_tile * hidden * f32)  # q / acc
    total = weights + inputs + output + kv_cache + transients
    return int(min(max(total * 5 // 4 + (2 << 20), 16 << 20), 100 << 20))


def attention_forward(hidden_states_2d, hidden_states_3d, params, num_heads,
                      out_dtype=jnp.float32):
    """Cross-attention forward (Attention.forward, vis=False, dropout = id).

    Returns (attention_output, None).  Pass out_dtype=jnp.bfloat16 to halve the
    HBM writeback (recommended on v5e) if downstream accepts bf16.
    """
    B, S, hidden = hidden_states_3d.shape
    assert hidden % num_heads == 0
    dh = hidden // num_heads
    scale = 1.0 / math.sqrt(dh)

    # Torch Linear stores weight as (out, in): transpose to (in, out) so
    # activations multiply from the left with lane-dense output.  Fold the
    # softmax scale into Wq / bq in f32 before the bf16 cast.
    w_all = jnp.stack(
        [params["wq"].T * scale, params["wk"].T, params["wv"].T, params["wo"].T],
        axis=0).astype(jnp.bfloat16)                                # (4, H, H)
    b_all = jnp.stack(
        [params["bq"] * scale, params["bk"], params["bv"], params["bo"]],
        axis=0).astype(jnp.float32)                                 # (4, H)

    x3 = hidden_states_3d.astype(jnp.bfloat16)   # Q, K source
    x2 = hidden_states_2d.astype(jnp.bfloat16)   # V source

    q_tile, S_pad = _choose_q_tile(S)
    num_q_tiles = S_pad // q_tile
    # Only the query source is padded; K/V always use the true S rows, so the
    # padding never perturbs the softmax.  Padded query rows are sliced off.
    x3q = x3 if S_pad == S else jnp.pad(x3, ((0, 0), (0, S_pad - S), (0, 0)))

    # Cache K transposed (hidden, S) only when the in-kernel transpose is
    # tile-aligned; otherwise keep (S, hidden) and let the MXU contract the
    # last dims directly (small / unaligned shapes).
    kt_layout = (S % 128 == 0) and (hidden % 128 == 0)
    kc_shape = (hidden, S) if kt_layout else (S, hidden)

    kernel = functools.partial(_cross_attention_kernel,
                               num_heads=num_heads, kt_layout=kt_layout)

    # Constant-index blocks (weights / biases): single-buffer them.
    const = dict(pipeline_mode=pl.Buffered(1))

    out = pl.pallas_call(
        kernel,
        out_shape=jax.ShapeDtypeStruct((B, S_pad, hidden), out_dtype),
        grid_spec=pltpu.PrefetchScalarGridSpec(
            num_scalar_prefetch=0,
            grid=(B, num_q_tiles),
            in_specs=[
                pl.BlockSpec((1, q_tile, hidden), lambda b, qi: (b, qi, 0)),   # Q src tile
                pl.BlockSpec((1, S, hidden), lambda b, qi: (b, 0, 0)),         # K src (full S)
                pl.BlockSpec((1, S, hidden), lambda b, qi: (b, 0, 0)),         # V src (full S)
                pl.BlockSpec((4, hidden, hidden), lambda b, qi: (0, 0, 0), **const),
                pl.BlockSpec((4, hidden), lambda b, qi: (0, 0), **const),
            ],
            out_specs=pl.BlockSpec((1, q_tile, hidden), lambda b, qi: (b, qi, 0)),
            scratch_shapes=[
                pltpu.VMEM(kc_shape, jnp.bfloat16),        # persistent K cache
                pltpu.VMEM((S, hidden), jnp.bfloat16),     # persistent V cache
            ],
        ),
        compiler_params=pltpu.CompilerParams(
            # Batch is parallel (megacore-shardable on v7x); the query-tile
            # axis carries the K/V scratch so it must be arbitrary.
            dimension_semantics=("parallel", "arbitrary"),
            vmem_limit_bytes=_vmem_limit_bytes(S, q_tile, hidden)),
    )(x3q, x3, x2, w_all, b_all)

    if S_pad != S:
        out = out[:, :S, :]
    return out, None   # vis=False -> weights is None


def reference_attention(hidden_states_2d, hidden_states_3d, params, num_heads):
    """Pure-JAX f32 reference mirroring the PyTorch forward exactly."""
    B, S, hidden = hidden_states_3d.shape
    dh = hidden // num_heads

    def linear(x, w, b):
        return x @ w.T + b

    q = linear(hidden_states_3d, params["wq"], params["bq"])
    k = linear(hidden_states_3d, params["wk"], params["bk"])
    v = linear(hidden_states_2d, params["wv"], params["bv"])

    def split_heads(x):
        return x.reshape(B, S, num_heads, dh).transpose(0, 2, 1, 3)

    q, k, v = split_heads(q), split_heads(k), split_heads(v)
    scores = jnp.einsum("bhqd,bhkd->bhqk", q, k) / math.sqrt(dh)
    probs = jax.nn.softmax(scores, axis=-1)
    ctx = jnp.einsum("bhqk,bhkd->bhqd", probs, v)
    ctx = ctx.transpose(0, 2, 1, 3).reshape(B, S, hidden)
    return linear(ctx, params["wo"], params["bo"])


def _make_params(key, hidden):
    keys = jax.random.split(key, 8)

    def winit(k, shape):
        return (0.02 * jax.random.normal(k, shape)).astype(jnp.float32)

    return {
        "wq": winit(keys[0], (hidden, hidden)), "bq": winit(keys[1], (hidden,)),
        "wk": winit(keys[2], (hidden, hidden)), "bk": winit(keys[3], (hidden,)),
        "wv": winit(keys[4], (hidden, hidden)), "bv": winit(keys[5], (hidden,)),
        "wo": winit(keys[6], (hidden, hidden)), "bo": winit(keys[7], (hidden,)),
    }


def _run_case(key, B, S, hidden, num_heads, atol):
    kp, k2, k3 = jax.random.split(key, 3)
    params = _make_params(kp, hidden)
    h2d = jax.random.normal(k2, (B, S, hidden), jnp.float32)
    h3d = jax.random.normal(k3, (B, S, hidden), jnp.float32)

    out, weights = attention_forward(h2d, h3d, params, num_heads)
    out = jax.block_until_ready(out)
    assert out.shape == (B, S, hidden)
    assert weights is None

    ref = reference_attention(h2d, h3d, params, num_heads)
    # bf16 MXU operands + approx reciprocal in the softmax -> loose tolerance.
    max_err = float(jnp.max(jnp.abs(out - ref)))
    assert jnp.allclose(out, ref, atol=atol, rtol=5e-2), (B, S, hidden, max_err)
    return max_err


if __name__ == "__main__":
    root = jax.random.PRNGKey(0)
    k1, k2 = jax.random.split(root, 2)

    # Module-consistent small config: hidden_size=32, num_heads=4, seq=8.
    _run_case(k1, B=2, S=8, hidden=32, num_heads=4, atol=1e-2)

    # Lane-aligned config exercising the transposed K cache, multi-tile query
    # axis with padding (S=640 -> S_pad=768, q_tile=256) and KV-cache reuse.
    _run_case(k2, B=1, S=640, hidden=128, num_heads=2, atol=1e-2)

    print("KERNEL_OK")
</pallas_src>

<mosaic_0001>
module attributes {stable_mosaic.version = 11 : i64} {
  func.func @_cross_attention_kernel(%arg0: i32, %arg1: i32, %arg2: memref<1x8x32xbf16, #tpu.memory_space<vmem>>, %arg3: memref<1x8x32xbf16, #tpu.memory_space<vmem>>, %arg4: memref<1x8x32xbf16, #tpu.memory_space<vmem>>, %arg5: memref<4x32x32xbf16, #tpu.memory_space<vmem>>, %arg6: memref<4x32xf32, #tpu.memory_space<vmem>>, %arg7: memref<1x8x32xf32, #tpu.memory_space<vmem>>, %arg8: memref<8x32xbf16, #tpu.memory_space<vmem>>, %arg9: memref<8x32xbf16, #tpu.memory_space<vmem>>) attributes {dimension_semantics = [#tpu.dimension_semantics<parallel>, #tpu.dimension_semantics<arbitrary>], iteration_bounds = array<i64: 2, 1>, scalar_prefetch = 0 : i64, scratch_operands = 2 : i64, tpu.core_type = #tpu.core_type<tc>, window_params = [{transform_indices = @transform_0, window_bounds = array<i64: 1, 8, 32>}, {transform_indices = @transform_1, window_bounds = array<i64: 1, 8, 32>}, {transform_indices = @transform_2, window_bounds = array<i64: 1, 8, 32>}, {pipeline_mode = #tpu.pipeline_mode<synchronous>, transform_indices = @transform_3, window_bounds = array<i64: 4, 32, 32>}, {pipeline_mode = #tpu.pipeline_mode<synchronous>, transform_indices = @transform_4, window_bounds = array<i64: 4, 32>}, {transform_indices = @transform_5, window_bounds = array<i64: 1, 8, 32>}]} {
    %c0_i32 = arith.constant 0 : i32
    %0 = arith.cmpi eq, %arg1, %c0_i32 : i32
    %1 = arith.extui %0 : i1 to i32
    %c0_i32_0 = arith.constant 0 : i32
    %2 = arith.cmpi ne, %1, %c0_i32_0 : i32
    scf.if %2 {
      %c0_58 = arith.constant 0 : index
      %c0_59 = arith.constant 0 : index
      %c0_60 = arith.constant 0 : index
      %103 = vector.load %arg3[%c0_58, %c0_59, %c0_60] : memref<1x8x32xbf16, #tpu.memory_space<vmem>>, vector<1x8x32xbf16>
      %104 = vector.shape_cast %103 : vector<1x8x32xbf16> to vector<8x32xbf16>
      %c1 = arith.constant 1 : index
      %c0_61 = arith.constant 0 : index
      %c0_62 = arith.constant 0 : index
      %105 = vector.load %arg5[%c1, %c0_61, %c0_62] : memref<4x32x32xbf16, #tpu.memory_space<vmem>>, vector<1x32x32xbf16>
      %106 = vector.shape_cast %105 : vector<1x32x32xbf16> to vector<32x32xbf16>
      %cst_63 = arith.constant dense<0.000000e+00> : vector<8x32xf32>
      %107 = tpu.matmul %104, %106, %cst_63 {dimension_numbers = #tpu.dot_dimension_numbers<[1], [0], [0], [1], [0, 0, 1, 1], [], []>} : vector<8x32xbf16>, vector<32x32xbf16>, vector<8x32xf32> -> vector<8x32xf32>
      %c1_64 = arith.constant 1 : index
      %c0_65 = arith.constant 0 : index
      %108 = vector.load %arg6[%c1_64, %c0_65] : memref<4x32xf32, #tpu.memory_space<vmem>>, vector<1x32xf32>
      %109 = vector.broadcast %108 : vector<1x32xf32> to vector<8x32xf32>
      %110 = arith.addf %107, %109 : vector<8x32xf32>
      %c0_66 = arith.constant 0 : index
      %c0_67 = arith.constant 0 : index
      %c0_68 = arith.constant 0 : index
      %111 = vector.load %arg4[%c0_66, %c0_67, %c0_68] : memref<1x8x32xbf16, #tpu.memory_space<vmem>>, vector<1x8x32xbf16>
      %112 = vector.shape_cast %111 : vector<1x8x32xbf16> to vector<8x32xbf16>
      %c2 = arith.constant 2 : index
      %c0_69 = arith.constant 0 : index
      %c0_70 = arith.constant 0 : index
      %113 = vector.load %arg5[%c2, %c0_69, %c0_70] : memref<4x32x32xbf16, #tpu.memory_space<vmem>>, vector<1x32x32xbf16>
      %114 = vector.shape_cast %113 : vector<1x32x32xbf16> to vector<32x32xbf16>
      %cst_71 = arith.constant dense<0.000000e+00> : vector<8x32xf32>
      %115 = tpu.matmul %112, %114, %cst_71 {dimension_numbers = #tpu.dot_dimension_numbers<[1], [0], [0], [1], [0, 0, 1, 1], [], []>} : vector<8x32xbf16>, vector<32x32xbf16>, vector<8x32xf32> -> vector<8x32xf32>
      %c2_72 = arith.constant 2 : index
      %c0_73 = arith.constant 0 : index
      %116 = vector.load %arg6[%c2_72, %c0_73] : memref<4x32xf32, #tpu.memory_space<vmem>>, vector<1x32xf32>
      %117 = vector.broadcast %116 : vector<1x32xf32> to vector<8x32xf32>
      %118 = arith.addf %115, %117 : vector<8x32xf32>
      %119 = arith.truncf %110 : vector<8x32xf32> to vector<8x32xbf16>
      %c0_74 = arith.constant 0 : index
      %c0_75 = arith.constant 0 : index
      %120 = vector.load %arg8[%c0_74, %c0_75] : memref<8x32xbf16, #tpu.memory_space<vmem>>, vector<8x32xbf16>
      tpu.vector_store %arg8[%c0_74, %c0_75], %119 {strides = array<i32>} : memref<8x32xbf16, #tpu.memory_space<vmem>>, vector<8x32xbf16>,
      %121 = arith.truncf %118 : vector<8x32xf32> to vector<8x32xbf16>
      %c0_76 = arith.constant 0 : index
      %c0_77 = arith.constant 0 : index
      %122 = vector.load %arg9[%c0_76, %c0_77] : memref<8x32xbf16, #tpu.memory_space<vmem>>, vector<8x32xbf16>
      tpu.vector_store %arg9[%c0_76, %c0_77], %121 {strides = array<i32>} : memref<8x32xbf16, #tpu.memory_space<vmem>>, vector<8x32xbf16>,
    } else {
    }
    %c0 = arith.constant 0 : index
    %c0_1 = arith.constant 0 : index
    %c0_2 = arith.constant 0 : index
    %3 = vector.load %arg2[%c0, %c0_1, %c0_2] : memref<1x8x32xbf16, #tpu.memory_space<vmem>>, vector<1x8x32xbf16>
    %4 = vector.shape_cast %3 : vector<1x8x32xbf16> to vector<8x32xbf16>
    %c0_3 = arith.constant 0 : index
    %c0_4 = arith.constant 0 : index
    %c0_5 = arith.constant 0 : index
    %5 = vector.load %arg5[%c0_3, %c0_4, %c0_5] : memref<4x32x32xbf16, #tpu.memory_space<vmem>>, vector<1x32x32xbf16>
    %6 = vector.shape_cast %5 : vector<1x32x32xbf16> to vector<32x32xbf16>
    %cst = arith.constant dense<0.000000e+00> : vector<8x32xf32>
    %7 = tpu.matmul %4, %6, %cst {dimension_numbers = #tpu.dot_dimension_numbers<[1], [0], [0], [1], [0, 0, 1, 1], [], []>} : vector<8x32xbf16>, vector<32x32xbf16>, vector<8x32xf32> -> vector<8x32xf32>
    %c0_6 = arith.constant 0 : index
    %c0_7 = arith.constant 0 : index
    %8 = vector.load %arg6[%c0_6, %c0_7] : memref<4x32xf32, #tpu.memory_space<vmem>>, vector<1x32xf32>
    %9 = vector.broadcast %8 : vector<1x32xf32> to vector<8x32xf32>
    %10 = arith.addf %7, %9 : vector<8x32xf32>
    %11 = arith.truncf %10 : vector<8x32xf32> to vector<8x32xbf16>
    %cst_8 = arith.constant 0.000000e+00 : f32
    %12 = vector.broadcast %cst_8 : f32 to vector<8x32xf32>
    %13 = vector.extract_strided_slice %11 {offsets = [0, 0], sizes = [8, 8], strides = [1, 1]} : vector<8x32xbf16> to vector<8x8xbf16>
    %c0_9 = arith.constant 0 : index
    %c0_10 = arith.constant 0 : index
    %14 = vector.load %arg8[%c0_9, %c0_10] : memref<8x32xbf16, #tpu.memory_space<vmem>>, vector<8x8xbf16>
    "tpu.trace_start"() <{level = 10 : i32, message = "qd,kd->qk"}> : () -> ()
    %cst_11 = arith.constant dense<0.000000e+00> : vector<8x8xf32>
    %15 = tpu.matmul %13, %14, %cst_11 {dimension_numbers = #tpu.dot_dimension_numbers<[1], [1], [0], [0], [0, 0, 1, 0], [], []>} : vector<8x8xbf16>, vector<8x8xbf16>, vector<8x8xf32> -> vector<8x8xf32>
    "tpu.trace_stop"() : () -> ()
    %cst_12 = arith.constant dense<0xFF800000> : vector<8xf32>
    %16 = vector.multi_reduction <maximumf>, %15, %cst_12 [1] : vector<8x8xf32> to vector<8xf32>
    %17 = vector.shape_cast %16 : vector<8xf32> to vector<8x1xf32>
    %18 = vector.broadcast %17 : vector<8x1xf32> to vector<8x8xf32>
    %19 = arith.subf %15, %18 : vector<8x8xf32>
    %20 = math.exp %19 : vector<8x8xf32>
    %cst_13 = arith.constant dense<0.000000e+00> : vector<8xf32>
    %21 = vector.multi_reduction <add>, %20, %cst_13 [1] : vector<8x8xf32> to vector<8xf32>
    %22 = vector.shape_cast %21 : vector<8xf32> to vector<8x1xf32>
    %23 = tpu.reciprocal %22 {approx = true} : vector<8x1xf32> -> vector<8x1xf32>
    %24 = vector.broadcast %23 : vector<8x1xf32> to vector<8x8xf32>
    %25 = arith.mulf %20, %24 : vector<8x8xf32>
    %26 = arith.truncf %25 : vector<8x8xf32> to vector<8x8xbf16>
    %c0_14 = arith.constant 0 : index
    %c0_15 = arith.constant 0 : index
    %27 = vector.load %arg9[%c0_14, %c0_15] : memref<8x32xbf16, #tpu.memory_space<vmem>>, vector<8x8xbf16>
    %cst_16 = arith.constant dense<0.000000e+00> : vector<8x8xf32>
    %28 = tpu.matmul %26, %27, %cst_16 {dimension_numbers = #tpu.dot_dimension_numbers<[1], [0], [0], [1], [0, 0, 1, 1], [], []>} : vector<8x8xbf16>, vector<8x8xbf16>, vector<8x8xf32> -> vector<8x8xf32>
    %29 = arith.truncf %28 : vector<8x8xf32> to vector<8x8xbf16>
    %c3 = arith.constant 3 : index
    %c0_17 = arith.constant 0 : index
    %c0_18 = arith.constant 0 : index
    %30 = vector.load %arg5[%c3, %c0_17, %c0_18] : memref<4x32x32xbf16, #tpu.memory_space<vmem>>, vector<1x8x32xbf16>
    %31 = vector.shape_cast %30 : vector<1x8x32xbf16> to vector<8x32xbf16>
    %cst_19 = arith.constant dense<0.000000e+00> : vector<8x32xf32>
    %32 = tpu.matmul %29, %31, %cst_19 {dimension_numbers = #tpu.dot_dimension_numbers<[1], [0], [0], [1], [0, 0, 1, 1], [], []>} : vector<8x8xbf16>, vector<8x32xbf16>, vector<8x32xf32> -> vector<8x32xf32>
    %33 = arith.addf %12, %32 : vector<8x32xf32>
    %34 = vector.extract_strided_slice %11 {offsets = [0, 8], sizes = [8, 8], strides = [1, 1]} : vector<8x32xbf16> to vector<8x8xbf16>
    %c0_20 = arith.constant 0 : index
    %c8 = arith.constant 8 : index
    %35 = vector.load %arg8[%c0_20, %c8] : memref<8x32xbf16, #tpu.memory_space<vmem>>, vector<8x8xbf16>
    "tpu.trace_start"() <{level = 10 : i32, message = "qd,kd->qk"}> : () -> ()
    %cst_21 = arith.constant dense<0.000000e+00> : vector<8x8xf32>
    %36 = tpu.matmul %34, %35, %cst_21 {dimension_numbers = #tpu.dot_dimension_numbers<[1], [1], [0], [0], [0, 0, 1, 0], [], []>} : vector<8x8xbf16>, vector<8x8xbf16>, vector<8x8xf32> -> vector<8x8xf32>
    "tpu.trace_stop"() : () -> ()
    %cst_22 = arith.constant dense<0xFF800000> : vector<8xf32>
    %37 = vector.multi_reduction <maximumf>, %36, %cst_22 [1] : vector<8x8xf32> to vector<8xf32>
    %38 = vector.shape_cast %37 : vector<8xf32> to vector<8x1xf32>
    %39 = vector.broadcast %38 : vector<8x1xf32> to vector<8x8xf32>
    %40 = arith.subf %36, %39 : vector<8x8xf32>
    %41 = math.exp %40 : vector<8x8xf32>
    %cst_23 = arith.constant dense<0.000000e+00> : vector<8xf32>
    %42 = vector.multi_reduction <add>, %41, %cst_23 [1] : vector<8x8xf32> to vector<8xf32>
    %43 = vector.shape_cast %42 : vector<8xf32> to vector<8x1xf32>
    %44 = tpu.reciprocal %43 {approx = true} : vector<8x1xf32> -> vector<8x1xf32>
    %45 = vector.broadcast %44 : vector<8x1xf32> to vector<8x8xf32>
    %46 = arith.mulf %41, %45 : vector<8x8xf32>
    %47 = arith.truncf %46 : vector<8x8xf32> to vector<8x8xbf16>
    %c0_24 = arith.constant 0 : index
    %c8_25 = arith.constant 8 : index
    %48 = vector.load %arg9[%c0_24, %c8_25] : memref<8x32xbf16, #tpu.memory_space<vmem>>, vector<8x8xbf16>
    %cst_26 = arith.constant dense<0.000000e+00> : vector<8x8xf32>
    %49 = tpu.matmul %47, %48, %cst_26 {dimension_numbers = #tpu.dot_dimension_numbers<[1], [0], [0], [1], [0, 0, 1, 1], [], []>} : vector<8x8xbf16>, vector<8x8xbf16>, vector<8x8xf32> -> vector<8x8xf32>
    %50 = arith.truncf %49 : vector<8x8xf32> to vector<8x8xbf16>
    %c3_27 = arith.constant 3 : index
    %c8_28 = arith.constant 8 : index
    %c0_29 = arith.constant 0 : index
    %51 = vector.load %arg5[%c3_27, %c8_28, %c0_29] : memref<4x32x32xbf16, #tpu.memory_space<vmem>>, vector<1x8x32xbf16>
    %52 = vector.shape_cast %51 : vector<1x8x32xbf16> to vector<8x32xbf16>
    %cst_30 = arith.constant dense<0.000000e+00> : vector<8x32xf32>
    %53 = tpu.matmul %50, %52, %cst_30 {dimension_numbers = #tpu.dot_dimension_numbers<[1], [0], [0], [1], [0, 0, 1, 1], [], []>} : vector<8x8xbf16>, vector<8x32xbf16>, vector<8x32xf32> -> vector<8x32xf32>
    %54 = arith.addf %33, %53 : vector<8x32xf32>
    %55 = vector.extract_strided_slice %11 {offsets = [0, 16], sizes = [8, 8], strides = [1, 1]} : vector<8x32xbf16> to vector<8x8xbf16>
    %c0_31 = arith.constant 0 : index
    %c16 = arith.constant 16 : index
    %56 = vector.load %arg8[%c0_31, %c16] : memref<8x32xbf16, #tpu.memory_space<vmem>>, vector<8x8xbf16>
    "tpu.trace_start"() <{level = 10 : i32, message = "qd,kd->qk"}> : () -> ()
    %cst_32 = arith.constant dense<0.000000e+00> : vector<8x8xf32>
    %57 = tpu.matmul %55, %56, %cst_32 {dimension_numbers = #tpu.dot_dimension_numbers<[1], [1], [0], [0], [0, 0, 1, 0], [], []>} : vector<8x8xbf16>, vector<8x8xbf16>, vector<8x8xf32> -> vector<8x8xf32>
    "tpu.trace_stop"() : () -> ()
    %cst_33 = arith.constant dense<0xFF800000> : vector<8xf32>
    %58 = vector.multi_reduction <maximumf>, %57, %cst_33 [1] : vector<8x8xf32> to vector<8xf32>
    %59 = vector.shape_cast %58 : vector<8xf32> to vector<8x1xf32>
    %60 = vector.broadcast %59 : vector<8x1xf32> to vector<8x8xf32>
    %61 = arith.subf %57, %60 : vector<8x8xf32>
    %62 = math.exp %61 : vector<8x8xf32>
    %cst_34 = arith.constant dense<0.000000e+00> : vector<8xf32>
    %63 = vector.multi_reduction <add>, %62, %cst_34 [1] : vector<8x8xf32> to vector<8xf32>
    %64 = vector.shape_cast %63 : vector<8xf32> to vector<8x1xf32>
    %65 = tpu.reciprocal %64 {approx = true} : vector<8x1xf32> -> vector<8x1xf32>
    %66 = vector.broadcast %65 : vector<8x1xf32> to vector<8x8xf32>
    %67 = arith.mulf %62, %66 : vector<8x8xf32>
    %68 = arith.truncf %67 : vector<8x8xf32> to vector<8x8xbf16>
    %c0_35 = arith.constant 0 : index
    %c16_36 = arith.constant 16 : index
    %69 = vector.load %arg9[%c0_35, %c16_36] : memref<8x32xbf16, #tpu.memory_space<vmem>>, vector<8x8xbf16>
    %cst_37 = arith.constant dense<0.000000e+00> : vector<8x8xf32>
    %70 = tpu.matmul %68, %69, %cst_37 {dimension_numbers = #tpu.dot_dimension_numbers<[1], [0], [0], [1], [0, 0, 1, 1], [], []>} : vector<8x8xbf16>, vector<8x8xbf16>, vector<8x8xf32> -> vector<8x8xf32>
    %71 = arith.truncf %70 : vector<8x8xf32> to vector<8x8xbf16>
    %c3_38 = arith.constant 3 : index
    %c16_39 = arith.constant 16 : index
    %c0_40 = arith.constant 0 : index
    %72 = vector.load %arg5[%c3_38, %c16_39, %c0_40] : memref<4x32x32xbf16, #tpu.memory_space<vmem>>, vector<1x8x32xbf16>
    %73 = vector.shape_cast %72 : vector<1x8x32xbf16> to vector<8x32xbf16>
    %cst_41 = arith.constant dense<0.000000e+00> : vector<8x32xf32>
    %74 = tpu.matmul %71, %73, %cst_41 {dimension_numbers = #tpu.dot_dimension_numbers<[1], [0], [0], [1], [0, 0, 1, 1], [], []>} : vector<8x8xbf16>, vector<8x32xbf16>, vector<8x32xf32> -> vector<8x32xf32>
    %75 = arith.addf %54, %74 : vector<8x32xf32>
    %76 = vector.extract_strided_slice %11 {offsets = [0, 24], sizes = [8, 8], strides = [1, 1]} : vector<8x32xbf16> to vector<8x8xbf16>
    %c0_42 = arith.constant 0 : index
    %c24 = arith.constant 24 : index
    %77 = vector.load %arg8[%c0_42, %c24] : memref<8x32xbf16, #tpu.memory_space<vmem>>, vector<8x8xbf16>
    "tpu.trace_start"() <{level = 10 : i32, message = "qd,kd->qk"}> : () -> ()
    %cst_43 = arith.constant dense<0.000000e+00> : vector<8x8xf32>
    %78 = tpu.matmul %76, %77, %cst_43 {dimension_numbers = #tpu.dot_dimension_numbers<[1], [1], [0], [0], [0, 0, 1, 0], [], []>} : vector<8x8xbf16>, vector<8x8xbf16>, vector<8x8xf32> -> vector<8x8xf32>
    "tpu.trace_stop"() : () -> ()
    %cst_44 = arith.constant dense<0xFF800000> : vector<8xf32>
    %79 = vector.multi_reduction <maximumf>, %78, %cst_44 [1] : vector<8x8xf32> to vector<8xf32>
    %80 = vector.shape_cast %79 : vector<8xf32> to vector<8x1xf32>
    %81 = vector.broadcast %80 : vector<8x1xf32> to vector<8x8xf32>
    %82 = arith.subf %78, %81 : vector<8x8xf32>
    %83 = math.exp %82 : vector<8x8xf32>
    %cst_45 = arith.constant dense<0.000000e+00> : vector<8xf32>
    %84 = vector.multi_reduction <add>, %83, %cst_45 [1] : vector<8x8xf32> to vector<8xf32>
    %85 = vector.shape_cast %84 : vector<8xf32> to vector<8x1xf32>
    %86 = tpu.reciprocal %85 {approx = true} : vector<8x1xf32> -> vector<8x1xf32>
    %87 = vector.broadcast %86 : vector<8x1xf32> to vector<8x8xf32>
    %88 = arith.mulf %83, %87 : vector<8x8xf32>
    %89 = arith.truncf %88 : vector<8x8xf32> to vector<8x8xbf16>
    %c0_46 = arith.constant 0 : index
    %c24_47 = arith.constant 24 : index
    %90 = vector.load %arg9[%c0_46, %c24_47] : memref<8x32xbf16, #tpu.memory_space<vmem>>, vector<8x8xbf16>
    %cst_48 = arith.constant dense<0.000000e+00> : vector<8x8xf32>
    %91 = tpu.matmul %89, %90, %cst_48 {dimension_numbers = #tpu.dot_dimension_numbers<[1], [0], [0], [1], [0, 0, 1, 1], [], []>} : vector<8x8xbf16>, vector<8x8xbf16>, vector<8x8xf32> -> vector<8x8xf32>
    %92 = arith.truncf %91 : vector<8x8xf32> to vector<8x8xbf16>
    %c3_49 = arith.constant 3 : index
    %c24_50 = arith.constant 24 : index
    %c0_51 = arith.constant 0 : index
    %93 = vector.load %arg5[%c3_49, %c24_50, %c0_51] : memref<4x32x32xbf16, #tpu.memory_space<vmem>>, vector<1x8x32xbf16>
    %94 = vector.shape_cast %93 : vector<1x8x32xbf16> to vector<8x32xbf16>
    %cst_52 = arith.constant dense<0.000000e+00> : vector<8x32xf32>
    %95 = tpu.matmul %92, %94, %cst_52 {dimension_numbers = #tpu.dot_dimension_numbers<[1], [0], [0], [1], [0, 0, 1, 1], [], []>} : vector<8x8xbf16>, vector<8x32xbf16>, vector<8x32xf32> -> vector<8x32xf32>
    %96 = arith.addf %75, %95 : vector<8x32xf32>
    %c3_53 = arith.constant 3 : index
    %c0_54 = arith.constant 0 : index
    %97 = vector.load %arg6[%c3_53, %c0_54] : memref<4x32xf32, #tpu.memory_space<vmem>>, vector<1x32xf32>
    %98 = vector.broadcast %97 : vector<1x32xf32> to vector<8x32xf32>
    %99 = arith.addf %96, %98 : vector<8x32xf32>
    %c0_55 = arith.constant 0 : index
    %c0_56 = arith.constant 0 : index
    %c0_57 = arith.constant 0 : index
    %100 = vector.load %arg7[%c0_55, %c0_56, %c0_57] : memref<1x8x32xf32, #tpu.memory_space<vmem>>, vector<1x8x32xf32>
    %101 = vector.shape_cast %100 : vector<1x8x32xf32> to vector<8x32xf32>
    %102 = vector.shape_cast %99 : vector<8x32xf32> to vector<1x8x32xf32>
    tpu.vector_store %arg7[%c0_55, %c0_56, %c0_57], %102 {strides = array<i32>} : memref<1x8x32xf32, #tpu.memory_space<vmem>>, vector<1x8x32xf32>,
    return
  }
  func.func @transform_0(%arg0: i32, %arg1: i32) -> (i32, i32, i32) {
    %c0_i32 = arith.constant 0 : i32
    %c0_i32_0 = arith.constant 0 : i32
    return %arg0, %arg1, %c0_i32 : i32, i32, i32
  }
  func.func @transform_1(%arg0: i32, %arg1: i32) -> (i32, i32, i32) {
    %c0_i32 = arith.constant 0 : i32
    %c0_i32_0 = arith.constant 0 : i32
    %c0_i32_1 = arith.constant 0 : i32
    return %arg0, %c0_i32, %c0_i32_0 : i32, i32, i32
  }
  func.func @transform_2(%arg0: i32, %arg1: i32) -> (i32, i32, i32) {
    %c0_i32 = arith.constant 0 : i32
    %c0_i32_0 = arith.constant 0 : i32
    %c0_i32_1 = arith.constant 0 : i32
    return %arg0, %c0_i32, %c0_i32_0 : i32, i32, i32
  }
  func.func @transform_3(%arg0: i32, %arg1: i32) -> (i32, i32, i32) {
    %c0_i32 = arith.constant 0 : i32
    %c0_i32_0 = arith.constant 0 : i32
    %c0_i32_1 = arith.constant 0 : i32
    %c0_i32_2 = arith.constant 0 : i32
    return %c0_i32, %c0_i32_0, %c0_i32_1 : i32, i32, i32
  }
  func.func @transform_4(%arg0: i32, %arg1: i32) -> (i32, i32) {
    %c0_i32 = arith.constant 0 : i32
    %c0_i32_0 = arith.constant 0 : i32
    %c0_i32_1 = arith.constant 0 : i32
    return %c0_i32, %c0_i32_0 : i32, i32
  }
  func.func @transform_5(%arg0: i32, %arg1: i32) -> (i32, i32, i32) {
    %c0_i32 = arith.constant 0 : i32
    %c0_i32_0 = arith.constant 0 : i32
    return %arg0, %arg1, %c0_i32 : i32, i32, i32
  }
}

</mosaic_0001>

<llo_original>
// kernel: tpu_custom_call.1
$region0: #{tpu_custom_call.1}
  #allocation0 [shape = 'u32[]', space=smem, size = 0x4, offset = 0x4, fixed_abs, tag = 'smem constant byte address 0x4 - core index']
  #allocation1 [shape = 'u32[144,128]{1,0:T(1,128)}', space=vmem, size = 0x12000, scoped, tag = 'internal scratch']
  #allocation2 [shape = 'bf16[8,32]{1,0:T(8,128)(2,1)}', space=vmem, size = 0x800, scoped, tag = 'scratch operand']
  #allocation3 [shape = 'bf16[8,32]{1,0:T(8,128)(2,1)}', space=vmem, size = 0x800, scoped, tag = 'scratch operand']
  %s0 = inlined_call_operand.hbm [shape: bf16[2,8,32], index: 0, kind: input, shape index: {}]
  %s1 = inlined_call_operand.hbm [shape: bf16[2,8,32], index: 1, kind: input, shape index: {}]
  %s2 = inlined_call_operand.hbm [shape: bf16[2,8,32], index: 2, kind: input, shape index: {}]
  %s3 = inlined_call_operand.hbm [shape: bf16[4,32,32], index: 3, kind: input, shape index: {}]
  %s4 = inlined_call_operand.vmem [shape: f32[4,32], index: 4, kind: input, shape index: {}]
  %s5 = inlined_call_operand.hbm [shape: f32[2,8,32], index: 5, kind: output, shape index: {}]
  %s6 = sld [smem:[#allocation0]]
  $region73: #{tpu_custom_call.1} parent=0
    _
  %s8 = ssub.s32 1, %s6
  %s9 = scalar_select 0, %s8, %s6
  $region1: #{tpu_custom_call.1} parent=0
    #allocation4 [shape = 'u8[4096]{0}', space=vmem, size = 0x1000, scoped, tag = 'input window, operand 0']
    #allocation5 [shape = 's32[2]{0}', space=sflag, size = 0x8, scoped, tag = 'scoped memory for tpu_custom_call.1']
    #allocation6 [shape = 's32[2]{0}', space=sflag, size = 0x8, scoped, tag = 'scoped memory for tpu_custom_call.1']
    #allocation7 [shape = 'u8[4096]{0}', space=vmem, size = 0x1000, scoped, tag = 'input window, operand 1']
    #allocation8 [shape = 's32[2]{0}', space=sflag, size = 0x8, scoped, tag = 'scoped memory for tpu_custom_call.1']
    #allocation9 [shape = 'u8[4096]{0}', space=vmem, size = 0x1000, scoped, tag = 'input window, operand 2']
    #allocation10 [shape = 'u8[32768]{0}', space=vmem, size = 0x8000, scoped, tag = 'input window, operand 3, single buffered']
    #allocation11 [shape = 's32[1]{0}', space=sflag, size = 0x4, scoped, tag = 'scoped memory for tpu_custom_call.1']
    #allocation12 [shape = 'u8[8192]{0}', space=vmem, size = 0x2000, scoped, tag = 'output window, operand 0']
    %10 = vsyncpa [#allocation5], 0
    %s11 = scalar_lea.sflag [#allocation5], 1
    %12 = vsyncpa %s11, 0
    %13 = vsyncpa [#allocation8], 0
    %s14 = scalar_lea.sflag [#allocation8], 1
    %15 = vsyncpa %s14, 0
    %16 = vsyncpa [#allocation11], 0
    %17 = vsyncpa [#allocation6], 0
    %s18 = scalar_lea.sflag [#allocation6], 1
    %19 = vsyncpa %s18, 0
    loop: start=0, step=1, limit=4
    $region2: #{tpu_custom_call.1} parent=1 // loop_pre_header
      _
    $region3: #{tpu_custom_call.1} parent=1 // loop_header
      %s21 = sphi 0, %s25
      %p22 = scmp.ge.s32.totalorder %s21, 4
      %s28 = sphi 0, %s40
      %s29 = sphi 0, %s36
      %s30 = sphi 0, %s28
      %s31 = sphi 0, %s29
      %s32 = sphi 0, %s30
      %s33 = sphi 0, %s31
      %s45 = sphi 0, %s47
      %s48 = sphi 0, %s45
      %s49 = sphi 0, %s48
      %s65 = sphi 0, %s49
      %s71 = sphi 0, %s73
      %s74 = sphi 0, %s71
      %s75 = sphi 0, %s74
      %s91 = sphi 0, %s75
      %s97 = sphi 0, %s99
      %s100 = sphi 0, %s97
      %s101 = sphi 0, %s100
      %s117 = sphi 0, %s101
      %s121 = sphi 0, %s121
      %s123 = sphi 0, %s121
      %s124 = sphi 0, %s123
      %s138 = sphi 0, %s124
      %s142 = sphi 0, %s142
      %s144 = sphi 0, %s142
      %s145 = sphi 0, %s144
      %s159 = sphi 0, %s145
      %s167 = sphi 0, %s169
      %s170 = sphi 0, %s167
      %s171 = sphi 0, %s170
      %s187 = sphi 0, %s171
    $region4: #{tpu_custom_call.1} parent=1 // loop_header_branch
      %24 = sbr.rel (%p22) target = $region8
    $region5: #{tpu_custom_call.1} parent=1 // loop_body
      %s26 = ssub.s32 %s21, 1
      %s27 = ssub.s32 %s21, 2
      %s34 = sadd.s32 1, %s29
      %p35 = scmp.ge.s32.totalorder %s34, 1
      %s36 = scalar_select %p35, 0, %s34
      %s37 = sadd.s32 1, %s28
      %s38 = scalar_select %p35, %s37, %s28
      %p39 = scmp.ge.s32.totalorder %s38, 2
      %s40 = scalar_select %p39, 0, %s38
      %s41 = ssub.s32 %s28, %s40
      %s42 = ssub.s32 %s29, %s36
      %s43 = sor.u32 %s41, %s42
      %p44 = scmp.eq.s32.totalorder %s43, 0
      %s46 = sadd.s32 %s45, 1
      %s47 = scalar_select %p44, %s45, %s46
      %p50 = pneg %p44
      %p51 = scmp.eq.s32.totalorder %s21, 1
      %p52 = por %p50, %p51
      %p53 = scmp.ne.s32.totalorder %s45, %s48
      %p54 = scmp.eq.s32.totalorder %s21, 0
      %p55 = por %p53, %p54
      %p56 = scmp.ne.s32.totalorder %s45, %s48
      %p57 = scmp.eq.s32.totalorder %s26, 1
      %p58 = por %p56, %p57
      %p59 = scmp.ne.s32.totalorder %s48, %s49
      %p60 = scmp.eq.s32.totalorder %s26, 0
      %p61 = por %p59, %p60
      %p62 = scmp.ne.s32.totalorder %s48, %s49
      %p63 = scmp.eq.s32.totalorder %s27, 1
      %p64 = por %p62, %p63
      %p66 = scmp.ne.s32.totalorder %s49, %s65
      %p67 = scmp.eq.s32.totalorder %s27, 0
      %p68 = por %p66, %p67
      %s69 = ssub.s32 %s28, %s40
      %p70 = scmp.eq.s32.totalorder %s69, 0
      %s72 = sadd.s32 %s71, 1
      %s73 = scalar_select %p70, %s71, %s72
      %p76 = pneg %p70
      %p77 = scmp.eq.s32.totalorder %s21, 1
      %p78 = por %p76, %p77
      %p79 = scmp.ne.s32.totalorder %s71, %s74
      %p80 = scmp.eq.s32.totalorder %s21, 0
      %p81 = por %p79, %p80
      %p82 = scmp.ne.s32.totalorder %s71, %s74
      %p83 = scmp.eq.s32.totalorder %s26, 1
      %p84 = por %p82, %p83
      %p85 = scmp.ne.s32.totalorder %s74, %s75
      %p86 = scmp.eq.s32.totalorder %s26, 0
      %p87 = por %p85, %p86
      %p88 = scmp.ne.s32.totalorder %s74, %s75
      %p89 = scmp.eq.s32.totalorder %s27, 1
      %p90 = por %p88, %p89
      %p92 = scmp.ne.s32.totalorder %s75, %s91
      %p93 = scmp.eq.s32.totalorder %s27, 0
      %p94 = por %p92, %p93
      %s95 = ssub.s32 %s28, %s40
      %p96 = scmp.eq.s32.totalorder %s95, 0
      %s98 = sadd.s32 %s97, 1
      %s99 = scalar_select %p96, %s97, %s98
      %p102 = pneg %p96
      %p103 = scmp.eq.s32.totalorder %s21, 1
      %p104 = por %p102, %p103
      %p105 = scmp.ne.s32.totalorder %s97, %s100
      %p106 = scmp.eq.s32.totalorder %s21, 0
      %p107 = por %p105, %p106
      %p108 = scmp.ne.s32.totalorder %s97, %s100
      %p109 = scmp.eq.s32.totalorder %s26, 1
      %p110 = por %p108, %p109
      %p111 = scmp.ne.s32.totalorder %s100, %s101
      %p112 = scmp.eq.s32.totalorder %s26, 0
      %p113 = por %p111, %p112
      %p114 = scmp.ne.s32.totalorder %s100, %s101
      %p115 = scmp.eq.s32.totalorder %s27, 1
      %p116 = por %p114, %p115
      %p118 = scmp.ne.s32.totalorder %s101, %s117
      %p119 = scmp.eq.s32.totalorder %s27, 0
      %p120 = por %p118, %p119
      %s122 = sadd.s32 %s121, 1
      %p125 = scmp.eq.s32.totalorder %s21, 1
      %p126 = scmp.ne.s32.totalorder %s121, %s123
      %p127 = scmp.eq.s32.totalorder %s21, 0
      %p128 = por %p126, %p127
      %p129 = scmp.ne.s32.totalorder %s121, %s123
      %p130 = scmp.eq.s32.totalorder %s26, 1
      %p131 = por %p129, %p130
      %p132 = scmp.ne.s32.totalorder %s123, %s124
      %p133 = scmp.eq.s32.totalorder %s26, 0
      %p134 = por %p132, %p133
      %p135 = scmp.ne.s32.totalorder %s123, %s124
      %p136 = scmp.eq.s32.totalorder %s27, 1
      %p137 = por %p135, %p136
      %p139 = scmp.ne.s32.totalorder %s124, %s138
      %p140 = scmp.eq.s32.totalorder %s27, 0
      %p141 = por %p139, %p140
      %s143 = sadd.s32 %s142, 1
      %p146 = scmp.eq.s32.totalorder %s21, 1
      %p147 = scmp.ne.s32.totalorder %s142, %s144
      %p148 = scmp.eq.s32.totalorder %s21, 0
      %p149 = por %p147, %p148
      %p150 = scmp.ne.s32.totalorder %s142, %s144
      %p151 = scmp.eq.s32.totalorder %s26, 1
      %p152 = por %p150, %p151
      %p153 = scmp.ne.s32.totalorder %s144, %s145
      %p154 = scmp.eq.s32.totalorder %s26, 0
      %p155 = por %p153, %p154
      %p156 = scmp.ne.s32.totalorder %s144, %s145
      %p157 = scmp.eq.s32.totalorder %s27, 1
      %p158 = por %p156, %p157
      %p160 = scmp.ne.s32.totalorder %s145, %s159
      %p161 = scmp.eq.s32.totalorder %s27, 0
      %p162 = por %p160, %p161
      %s163 = ssub.s32 %s28, %s40
      %s164 = ssub.s32 %s29, %s36
      %s165 = sor.u32 %s163, %s164
      %p166 = scmp.eq.s32.totalorder %s165, 0
      %s168 = sadd.s32 %s167, 1
      %s169 = scalar_select %p166, %s167, %s168
      %p172 = pneg %p166
      %p173 = scmp.eq.s32.totalorder %s21, 1
      %p174 = por %p172, %p173
      %p175 = scmp.ne.s32.totalorder %s167, %s170
      %p176 = scmp.eq.s32.totalorder %s21, 0
      %p177 = por %p175, %p176
      %p178 = scmp.ne.s32.totalorder %s167, %s170
      %p179 = scmp.eq.s32.totalorder %s26, 1
      %p180 = por %p178, %p179
      %p181 = scmp.ne.s32.totalorder %s170, %s171
      %p182 = scmp.eq.s32.totalorder %s26, 0
      %p183 = por %p181, %p182
      %p184 = scmp.ne.s32.totalorder %s170, %s171
      %p185 = scmp.eq.s32.totalorder %s27, 1
      %p186 = por %p184, %p185
      %p188 = scmp.ne.s32.totalorder %s171, %s187
      %p189 = scmp.eq.s32.totalorder %s27, 0
      %p190 = por %p188, %p189
      %p191 = scmp.le.s32.totalorder 1, %s21
      %p192 = scmp.lt.s32.totalorder %s21, 3
      %p193 = pnand %p191, %p192
      %p194 = pneg %p193
      // Predicated region
      $region9: #{tpu_custom_call.1} parent=5 // pred_check
        _
      $region10: #{tpu_custom_call.1} parent=5 // pred_check_branch
        %196 = sbr.rel (%p193) target = $region12
      $region11: #{tpu_custom_call.1} parent=5 // pred_region
        %s197 = ssub.s32 %s21, 1
        // Predicated region
        $region13: #{tpu_custom_call.1} parent=11 // pred_check
          %p198 = pneg %p134
        $region14: #{tpu_custom_call.1} parent=11 // pred_check_branch
          %200 = sbr.rel (%p198) target = $region16
        $region15: #{tpu_custom_call.1} parent=11 // pred_region
          %s202 = ssub.s32 1024, 1024
          %203 = vsyncadd [#allocation11], %s202
          %s204 = sshll.u32 [#allocation10], 4
          %s205 = int_to_ptr.vmem [resolvable:$true] %s204
          %210 = dma.hbm_to_vmem [thread:$0]  %s3, 1024, %s205, [#allocation11], 64, 64, 4
        $region16: #{tpu_custom_call.1} parent=11 // pred_fallthru
          _
        // Predicated region
        $region17: #{tpu_custom_call.1} parent=11 // pred_check
          %p211 = pneg %p155
        $region18: #{tpu_custom_call.1} parent=11 // pred_check_branch
          %213 = sbr.rel (%p211) target = $region20
        $region19: #{tpu_custom_call.1} parent=11 // pred_region
          _
        $region20: #{tpu_custom_call.1} parent=11 // pred_fallthru
          _
      $region12: #{tpu_custom_call.1} parent=5 // pred_fallthru
        _
      %p214 = scmp.lt.s32.totalorder %s21, 2
      // Predicated region
      $region21: #{tpu_custom_call.1} parent=5 // pred_check
        %p215 = pneg %p214
      $region22: #{tpu_custom_call.1} parent=5 // pred_check_branch
        %217 = sbr.rel (%p215) target = $region24
      $region23: #{tpu_custom_call.1} parent=5 // pred_region
        // Predicated region
        $region25: #{tpu_custom_call.1} parent=23 // pred_check
          %p218 = pneg %p55
        $region26: #{tpu_custom_call.1} parent=23 // pred_check_branch
          %220 = sbr.rel (%p218) target = $region28
        $region27: #{tpu_custom_call.1} parent=23 // pred_region
          %s221 = sand.u32 %s45, 1
          %s222 = scalar_lea.sflag [#allocation5], %s221
          %s223 = sand.u32 %s45, 1
          %s224 = smul.addr %s223, 4
          %s225 = scalar_lea.vmem [#allocation4], %s224
          %s227 = ssub.s32 64, 64
          %228 = vsyncadd %s222, %s227
          %s229 = sadd.s32 %s29, %s28
          %s230 = smul.addr %s229, 64
          %s231 = scalar_lea.hbm %s0, %s230
          %s233 = sshll.u32 %s225, 4
          %s234 = int_to_ptr.vmem [resolvable:$true] %s233
          %236 = dma.hbm_to_vmem [thread:$0]  %s231, 64, %s234, %s222
        $region28: #{tpu_custom_call.1} parent=23 // pred_fallthru
          _
        // Predicated region
        $region29: #{tpu_custom_call.1} parent=23 // pred_check
          %p237 = pneg %p81
        $region30: #{tpu_custom_call.1} parent=23 // pred_check_branch
          %239 = sbr.rel (%p237) target = $region32
        $region31: #{tpu_custom_call.1} parent=23 // pred_region
          %s240 = sand.u32 %s21, 1
          %s241 = scalar_lea.sflag [#allocation8], %s240
          %s242 = sand.u32 %s71, 1
          %s243 = smul.addr %s242, 4
          %s244 = scalar_lea.vmem [#allocation7], %s243
          %s246 = ssub.s32 64, 64
          %247 = vsyncadd %s241, %s246
          %s248 = smul.addr %s28, 64
          %s249 = scalar_lea.hbm %s1, %s248
          %s251 = sshll.u32 %s244, 4
          %s252 = int_to_ptr.vmem [resolvable:$true] %s251
          %254 = dma.hbm_to_vmem [thread:$0]  %s249, 64, %s252, %s241
        $region32: #{tpu_custom_call.1} parent=23 // pred_fallthru
          _
        // Predicated region
        $region33: #{tpu_custom_call.1} parent=23 // pred_check
          %p255 = pneg %p107
        $region34: #{tpu_custom_call.1} parent=23 // pred_check_branch
          %257 = sbr.rel (%p255) target = $region36
        $region35: #{tpu_custom_call.1} parent=23 // pred_region
          %s258 = sand.u32 %s21, 1
          %s259 = scalar_lea.sflag [#allocation8], %s258
          %s260 = sand.u32 %s97, 1
          %s261 = smul.addr %s260, 4
          %s262 = scalar_lea.vmem [#allocation9], %s261
          %s264 = ssub.s32 64, 64
          %265 = vsyncadd %s259, %s264
          %s266 = smul.addr %s28, 64
          %s267 = scalar_lea.hbm %s2, %s266
          %s269 = sshll.u32 %s262, 4
          %s270 = int_to_ptr.vmem [resolvable:$true] %s269
          %272 = dma.hbm_to_vmem [thread:$0]  %s267, 64, %s270, %s259
        $region36: #{tpu_custom_call.1} parent=23 // pred_fallthru
          _
      $region24: #{tpu_custom_call.1} parent=5 // pred_fallthru
        _
      %p273 = scmp.le.s32.totalorder 1, %s21
      %p274 = scmp.lt.s32.totalorder %s21, 3
      %p275 = pnand %p273, %p274
      %p276 = pneg %p275
      // Predicated region
      $region37: #{tpu_custom_call.1} parent=5 // pred_check
        _
      $region38: #{tpu_custom_call.1} parent=5 // pred_check_branch
        %278 = sbr.rel (%p275) target = $region40
      $region39: #{tpu_custom_call.1} parent=5 // pred_region
        %s279 = ssub.s32 %s21, 1
        %s280 = sand.u32 %s48, 1
        %s281 = scalar_lea.sflag [#allocation5], %s280
        %s282 = sand.u32 %s48, 1
        %s283 = smul.addr %s282, 4
        %s284 = scalar_lea.vmem [#allocation4], %s283
        // Predicated region
        $region41: #{tpu_custom_call.1} parent=39 // pred_check
          %p285 = pneg %p61
        $region42: #{tpu_custom_call.1} parent=39 // pred_check_branch
          %287 = sbr.rel (%p285) target = $region44
        $region43: #{tpu_custom_call.1} parent=39 // pred_region
          %288 = dma.done %s281, 64
        $region44: #{tpu_custom_call.1} parent=39 // pred_fallthru
          _
        %s289 = sand.u32 %s26, 1
        %s290 = scalar_lea.sflag [#allocation8], %s289
        %s291 = sand.u32 %s74, 1
        %s292 = smul.addr %s291, 4
        %s293 = scalar_lea.vmem [#allocation7], %s292
        // Predicated region
        $region45: #{tpu_custom_call.1} parent=39 // pred_check
          %p294 = pneg %p87
        $region46: #{tpu_custom_call.1} parent=39 // pred_check_branch
          %296 = sbr.rel (%p294) target = $region48
        $region47: #{tpu_custom_call.1} parent=39 // pred_region
          %297 = dma.done %s290, 64
        $region48: #{tpu_custom_call.1} parent=39 // pred_fallthru
          _
        %s298 = sand.u32 %s26, 1
        %s299 = scalar_lea.sflag [#allocation8], %s298
        %s300 = sand.u32 %s100, 1
        %s301 = smul.addr %s300, 4
        %s302 = scalar_lea.vmem [#allocation9], %s301
        // Predicated region
        $region49: #{tpu_custom_call.1} parent=39 // pred_check
          %p303 = pneg %p113
        $region50: #{tpu_custom_call.1} parent=39 // pred_check_branch
          %305 = sbr.rel (%p303) target = $region52
        $region51: #{tpu_custom_call.1} parent=39 // pred_region
          %306 = dma.done %s299, 64
        $region52: #{tpu_custom_call.1} parent=39 // pred_fallthru
          _
        // Predicated region
        $region53: #{tpu_custom_call.1} parent=39 // pred_check
          %p307 = pneg %p134
        $region54: #{tpu_custom_call.1} parent=39 // pred_check_branch
          %309 = sbr.rel (%p307) target = $region56
        $region55: #{tpu_custom_call.1} parent=39 // pred_region
          %310 = dma.done [#allocation11], 1024
        $region56: #{tpu_custom_call.1} parent=39 // pred_fallthru
          _
        %s311 = sand.u32 %s48, 1
        %s312 = scalar_lea.sflag [#allocation5], %s311
        %s313 = sand.u32 %s48, 1
        %s314 = smul.addr %s313, 4
        %s315 = scalar_lea.vmem [#allocation4], %s314
        %p316 = pneg %p61
        %p317 = pneg %p58
        %s318 = sand.u32 %s26, 1
        %s319 = scalar_lea.sflag [#allocation8], %s318
        %s320 = sand.u32 %s74, 1
        %s321 = smul.addr %s320, 4
        %s322 = scalar_lea.vmem [#allocation7], %s321
        %p323 = pneg %p87
        %p324 = pneg %p84
        %s325 = sand.u32 %s26, 1
        %s326 = scalar_lea.sflag [#allocation8], %s325
        %s327 = sand.u32 %s100, 1
        %s328 = smul.addr %s327, 4
        %s329 = scalar_lea.vmem [#allocation9], %s328
        %p330 = pneg %p113
        %p331 = pneg %p110
        %p332 = pneg %p134
        %p333 = pneg %p131
        %p334 = pneg %p155
        %p335 = pneg %p152
        %p336 = pneg %p183
        %p337 = pneg %p180
        %s338 = sand.u32 %s170, 1
        %s339 = scalar_lea.sflag [#allocation6], %s338
        %s340 = sand.u32 %s170, 1
        %s341 = smul.addr %s340, 8
        %s342 = scalar_lea.vmem [#allocation12], %s341
        %p344 = scmp.eq.s32.totalorder %s31, 0
        // Predicated region
        $region57: #{tpu_custom_call.1} parent=39 // pred_check
          %p345 = pneg %p344
        $region58: #{tpu_custom_call.1} parent=39 // pred_check_branch
          %347 = sbr.rel (%p345) target = $region60
        $region59: #{tpu_custom_call.1} parent=39 // pred_region
          %v348 = vld [vmem:[%s293] sm:$0xf]
          %s349 = scalar_lea.vmem [#allocation10], 16
          %v350 = vld [vmem:[%s349] sm:$0xf]
          %v351 = vld [vmem:[%s349 + $0x4] sm:$0xf]
          %v352 = vld [vmem:[%s349 + $0x8] sm:$0xf]
          %v353 = vld [vmem:[%s349 + $0xc] sm:$0xf]
          %v354 = vld [vmem:[%s4 + $0x1] sm:$0x1]
          %v355 = vlaneseq
          %v356 = vshrl.u32 %v355, 7
          %v357 = vsub.s32 0, %v356
          %v358 = vrot.slane %v354, %v357
          %v363 = vunpack.c.l.b16 %v350
          %v364 = vunpack.c.l.b16 %v351
          %v365 = vunpack.c.l.b16 %v352
          %v366 = vunpack.c.l.b16 %v353
          %v367 = vpack.c.b16 %v364, %v363
          %v368 = vpack.c.b16 %v366, %v365
          %vm371 = vcmask 261120
          %v373 = vsel %vm371, %v348, 0
          %375 = vmatprep.subr.bf16.mxu0 0
          %376 = vmatpush1.bf16.msra.mxu0 0
          %377 = vmatprep.subr.bf16.mxu0 0
          %378 = vmatpush1.bf16.msra.mxu0 0
          %379 = vmatprep.subr.bf16.mxu0 0
          %380 = vmatpush1.bf16.msra.mxu0 0
          %381 = vmatprep.subr.bf16.mxu0 0
          %382 = vmatpush1.bf16.msra.mxu0 0
          %383 = vmatprep.subr.bf16.mxu0 0
          %384 = vmatpush1.bf16.msra.mxu0 0
          %385 = vmatprep.subr.bf16.mxu0 0
          %386 = vmatpush1.bf16.msra.mxu0 0
          %387 = vmatprep.subr.bf16.mxu0 0
          %388 = vmatpush1.bf16.msra.mxu0 %v368
          %389 = vmatprep.subr.bf16.mxu0 0
          %390 = vmatpush1.bf16.msra.mxu0 %v367
          %391 = vmatprep.subr.bf16.mxu0 0
          %392 = vmatpush2.bf16.msra.mxu0 0
          %393 = vmatprep.subr.bf16.mxu0 0
          %394 = vmatpush2.bf16.msra.mxu0 0
          %395 = vmatprep.subr.bf16.mxu0 0
          %396 = vmatpush2.bf16.msra.mxu0 0
          %397 = vmatprep.subr.bf16.mxu0 0
          %398 = vmatpush2.bf16.msra.mxu0 0
          %399 = vmatprep.subr.bf16.mxu0 0
          %400 = vmatpush2.bf16.msra.mxu0 0
          %401 = vmatprep.subr.bf16.mxu0 0
          %402 = vmatpush2.bf16.msra.mxu0 0
          %403 = vmatprep.subr.bf16.mxu0 0
          %404 = vmatpush2.bf16.msra.mxu0 0
          %405 = vmatprep.subr.bf16.mxu0 0
          %406 = vmatpush2.bf16.msra.mxu0 0
          %407 = vmatprep.mubr.bf16.mxu0 0
          %408 = vmatmul.mubr.bf16.gmra.mxu0 %v373
          %v409 = vpop.f32.mrf.mxu0
          %v410 = vadd.f32 %v358, %v409
          %v411 = vpop.f32.mrf.mxu0
          %v412 = vpop.f32.mrf.mxu0
          %v413 = vpop.f32.mrf.mxu0
          %414 = vdwg.mxu0
          %v415 = vld [vmem:[%s302] sm:$0xf]
          %s416 = scalar_lea.vmem [#allocation10], 32
          %v417 = vld [vmem:[%s416] sm:$0xf]
          %v418 = vld [vmem:[%s416 + $0x4] sm:$0xf]
          %v419 = vld [vmem:[%s416 + $0x8] sm:$0xf]
          %v420 = vld [vmem:[%s416 + $0xc] sm:$0xf]
          %v421 = vld [vmem:[%s4 + $0x2] sm:$0x1]
          %v422 = vlaneseq
          %v423 = vshrl.u32 %v422, 7
          %v424 = vsub.s32 0, %v423
          %v425 = vrot.slane %v421, %v424
          %v430 = vunpack.c.l.b16 %v417
          %v431 = vunpack.c.l.b16 %v418
          %v432 = vunpack.c.l.b16 %v419
          %v433 = vunpack.c.l.b16 %v420
          %v434 = vpack.c.b16 %v431, %v430
          %v435 = vpack.c.b16 %v433, %v432
          %v439 = vsel %vm371, %v415, 0
          %441 = vmatprep.subr.bf16.mxu0 0
          %442 = vmatpush1.bf16.msra.mxu0 0
          %443 = vmatprep.subr.bf16.mxu0 0
          %444 = vmatpush1.bf16.msra.mxu0 0
          %445 = vmatprep.subr.bf16.mxu0 0
          %446 = vmatpush1.bf16.msra.mxu0 0
          %447 = vmatprep.subr.bf16.mxu0 0
          %448 = vmatpush1.bf16.msra.mxu0 0
          %449 = vmatprep.subr.bf16.mxu0 0
          %450 = vmatpush1.bf16.msra.mxu0 0
          %451 = vmatprep.subr.bf16.mxu0 0
          %452 = vmatpush1.bf16.msra.mxu0 0
          %453 = vmatprep.subr.bf16.mxu0 0
          %454 = vmatpush1.bf16.msra.mxu0 %v435
          %455 = vmatprep.subr.bf16.mxu0 0
          %456 = vmatpush1.bf16.msra.mxu0 %v434
          %457 = vmatprep.subr.bf16.mxu0 0
          %458 = vmatpush2.bf16.msra.mxu0 0
          %459 = vmatprep.subr.bf16.mxu0 0
          %460 = vmatpush2.bf16.msra.mxu0 0
          %461 = vmatprep.subr.bf16.mxu0 0
          %462 = vmatpush2.bf16.msra.mxu0 0
          %463 = vmatprep.subr.bf16.mxu0 0
          %464 = vmatpush2.bf16.msra.mxu0 0
          %465 = vmatprep.subr.bf16.mxu0 0
          %466 = vmatpush2.bf16.msra.mxu0 0
          %467 = vmatprep.subr.bf16.mxu0 0
          %468 = vmatpush2.bf16.msra.mxu0 0
          %469 = vmatprep.subr.bf16.mxu0 0
          %470 = vmatpush2.bf16.msra.mxu0 0
          %471 = vmatprep.subr.bf16.mxu0 0
          %472 = vmatpush2.bf16.msra.mxu0 0
          %473 = vmatprep.mubr.bf16.mxu0 0
          %474 = vmatmul.mubr.bf16.gmra.mxu0 %v439
          %v475 = vpop.f32.mrf.mxu0
          %v476 = vadd.f32 %v425, %v475
          %v477 = vpop.f32.mrf.mxu0
          %v478 = vpop.f32.mrf.mxu0
          %v479 = vpop.f32.mrf.mxu0
          %480 = vdwg.mxu0
          %v481 = vpack.c.bf16 %v410, %v410
          %vm482 = vcmask 257024
          %483 = vst.msk [vmem:[#allocation2] sm:$0xf] %vm482, %v481
          %v484 = vpack.c.bf16 %v476, %v476
          %485 = vst.msk [vmem:[#allocation3] sm:$0xf] %vm482, %v484
        $region60: #{tpu_custom_call.1} parent=39 // pred_fallthru
          _
        %v486 = vld [vmem:[%s284] sm:$0xf]
        %v487 = vld [vmem:[#allocation10] sm:$0xf]
        %v488 = vld [vmem:[#allocation10 + $0x4] sm:$0xf]
        %v489 = vld [vmem:[#allocation10 + $0x8] sm:$0xf]
        %v490 = vld [vmem:[#allocation10 + $0xc] sm:$0xf]
        %v491 = vld [vmem:[%s4] sm:$0x1]
        %v492 = vlaneseq
        %v493 = vshrl.u32 %v492, 7
        %v494 = vsub.s32 0, %v493
        %v495 = vrot.slane %v491, %v494
        %v500 = vunpack.c.l.b16 %v487
        %v501 = vunpack.c.l.b16 %v488
        %v502 = vunpack.c.l.b16 %v489
        %v503 = vunpack.c.l.b16 %v490
        %v504 = vpack.c.b16 %v501, %v500
        %v505 = vpack.c.b16 %v503, %v502
        %vm508 = vcmask 261120
        %v510 = vsel %vm508, %v486, 0
        %512 = vmatprep.subr.bf16.mxu0 0
        %513 = vmatpush1.bf16.msra.mxu0 0
        %514 = vmatprep.subr.bf16.mxu0 0
        %515 = vmatpush1.bf16.msra.mxu0 0
        %516 = vmatprep.subr.bf16.mxu0 0
        %517 = vmatpush1.bf16.msra.mxu0 0
        %518 = vmatprep.subr.bf16.mxu0 0
        %519 = vmatpush1.bf16.msra.mxu0 0
        %520 = vmatprep.subr.bf16.mxu0 0
        %521 = vmatpush1.bf16.msra.mxu0 0
        %522 = vmatprep.subr.bf16.mxu0 0
        %523 = vmatpush1.bf16.msra.mxu0 0
        %524 = vmatprep.subr.bf16.mxu0 0
        %525 = vmatpush1.bf16.msra.mxu0 %v505
        %526 = vmatprep.subr.bf16.mxu0 0
        %527 = vmatpush1.bf16.msra.mxu0 %v504
        %528 = vmatprep.subr.bf16.mxu0 0
        %529 = vmatpush2.bf16.msra.mxu0 0
        %530 = vmatprep.subr.bf16.mxu0 0
        %531 = vmatpush2.bf16.msra.mxu0 0
        %532 = vmatprep.subr.bf16.mxu0 0
        %533 = vmatpush2.bf16.msra.mxu0 0
        %534 = vmatprep.subr.bf16.mxu0 0
        %535 = vmatpush2.bf16.msra.mxu0 0
        %536 = vmatprep.subr.bf16.mxu0 0
        %537 = vmatpush2.bf16.msra.mxu0 0
        %538 = vmatprep.subr.bf16.mxu0 0
        %539 = vmatpush2.bf16.msra.mxu0 0
        %540 = vmatprep.subr.bf16.mxu0 0
        %541 = vmatpush2.bf16.msra.mxu0 0
        %542 = vmatprep.subr.bf16.mxu0 0
        %543 = vmatpush2.bf16.msra.mxu0 0
        %544 = vmatprep.mubr.bf16.mxu0 0
        %545 = vmatmul.mubr.bf16.gmra.mxu0 %v510
        %v546 = vpop.f32.mrf.mxu0
        %v547 = vadd.f32 %v495, %v546
        %v548 = vpop.f32.mrf.mxu0
        %v549 = vpop.f32.mrf.mxu0
        %v550 = vpop.f32.mrf.mxu0
        %551 = vdwg.mxu0
        %v552 = vpack.c.bf16 %v547, %v547
        %v553 = vld [vmem:[#allocation2] sm:$0xf]
        %vm554 = vcmask 64512
        %v556 = vsel %vm554, %v552, 0
        %v559 = vsel %vm554, %v553, 0
        %561 = vmatprep.subr.bf16.mxu0 0
        %562 = vmatpush1.bf16.xpose.msra.mxu0 0
        %563 = vmatprep.subr.bf16.mxu0 0
        %564 = vmatpush1.bf16.xpose.msra.mxu0 0
        %565 = vmatprep.subr.bf16.mxu0 0
        %566 = vmatpush1.bf16.xpose.msra.mxu0 0
        %567 = vmatprep.subr.bf16.mxu0 0
        %568 = vmatpush1.bf16.xpose.msra.mxu0 0
        %569 = vmatprep.subr.bf16.mxu0 0
        %570 = vmatpush1.bf16.xpose.msra.mxu0 0
        %571 = vmatprep.subr.bf16.mxu0 0
        %572 = vmatpush1.bf16.xpose.msra.mxu0 0
        %573 = vmatprep.subr.bf16.mxu0 0
        %574 = vmatpush1.bf16.xpose.msra.mxu0 0
        %575 = vmatprep.subr.bf16.mxu0 0
        %576 = vmatpush1.bf16.xpose.msra.mxu0 %v559
        %577 = vmatprep.subr.bf16.mxu0 0
        %578 = vmatpush2.bf16.xpose.msra.mxu0 0
        %579 = vmatprep.subr.bf16.mxu0 0
        %580 = vmatpush2.bf16.xpose.msra.mxu0 0
        %581 = vmatprep.subr.bf16.mxu0 0
        %582 = vmatpush2.bf16.xpose.msra.mxu0 0
        %583 = vmatprep.subr.bf16.mxu0 0
        %584 = vmatpush2.bf16.xpose.msra.mxu0 0
        %585 = vmatprep.subr.bf16.mxu0 0
        %586 = vmatpush2.bf16.xpose.msra.mxu0 0
        %587 = vmatprep.subr.bf16.mxu0 0
        %588 = vmatpush2.bf16.xpose.msra.mxu0 0
        %589 = vmatprep.subr.bf16.mxu0 0
        %590 = vmatpush2.bf16.xpose.msra.mxu0 0
        %591 = vmatprep.subr.bf16.mxu0 0
        %592 = vmatpush2.bf16.xpose.msra.mxu0 0
        %593 = vmatprep.mubr.bf16.mxu0 0
        %594 = vmatmul.mubr.bf16.gmra.mxu0 %v556
        %v595 = vpop.f32.mrf.mxu0
        %v596 = vadd.f32 0.0, %v595
        %v597 = vpop.f32.mrf.mxu0
        %v598 = vpop.f32.mrf.mxu0
        %v599 = vpop.f32.mrf.mxu0
        %600 = vdwg.mxu0
        %v601 = vsel %vm554, %v596, -inf
        %602 = vmax.xlane.f32.xlu0 %v601
        %v603 = vpop.xlane.xlu0 %602
        %v604 = vsub.f32 %v596, %v603
        %v605 = vmul.f32 %v604, 1.442695
        %v606 = vpow.pop %v605
        %v607 = vsel %vm554, %v606, 0.0
        %608 = vadd.xlane.f32.xlu0 %v607
        %v609 = vpop.xlane.xlu0 %608
        %v610 = vrcp.pop %v609
        %v611 = vmul.f32 %v606, %v610
        %v612 = vpack.c.bf16 %v611, %v611
        %v613 = vld [vmem:[#allocation3] sm:$0xf]
        %v615 = vsel %vm554, %v612, 0
        %vm617 = vcmask 1043456
        %v619 = vsel %vm617, %v613, 0
        %621 = vmatprep.subr.bf16.mxu0 0
        %622 = vmatpush1.bf16.msra.mxu0 0
        %623 = vmatprep.subr.bf16.mxu0 0
        %624 = vmatpush1.bf16.msra.mxu0 0
        %625 = vmatprep.subr.bf16.mxu0 0
        %626 = vmatpush1.bf16.msra.mxu0 0
        %627 = vmatprep.subr.bf16.mxu0 0
        %628 = vmatpush1.bf16.msra.mxu0 0
        %629 = vmatprep.subr.bf16.mxu0 0
        %630 = vmatpush1.bf16.msra.mxu0 0
        %631 = vmatprep.subr.bf16.mxu0 0
        %632 = vmatpush1.bf16.msra.mxu0 0
        %633 = vmatprep.subr.bf16.mxu0 0
        %634 = vmatpush1.bf16.msra.mxu0 0
        %635 = vmatprep.subr.bf16.mxu0 0
        %636 = vmatpush1.bf16.msra.mxu0 %v619
        %637 = vmatprep.subr.bf16.mxu0 0
        %638 = vmatpush2.bf16.msra.mxu0 0
        %639 = vmatprep.subr.bf16.mxu0 0
        %640 = vmatpush2.bf16.msra.mxu0 0
        %641 = vmatprep.subr.bf16.mxu0 0
        %642 = vmatpush2.bf16.msra.mxu0 0
        %643 = vmatprep.subr.bf16.mxu0 0
        %644 = vmatpush2.bf16.msra.mxu0 0
        %645 = vmatprep.subr.bf16.mxu0 0
        %646 = vmatpush2.bf16.msra.mxu0 0
        %647 = vmatprep.subr.bf16.mxu0 0
        %648 = vmatpush2.bf16.msra.mxu0 0
        %649 = vmatprep.subr.bf16.mxu0 0
        %650 = vmatpush2.bf16.msra.mxu0 0
        %651 = vmatprep.subr.bf16.mxu0 0
        %652 = vmatpush2.bf16.msra.mxu0 0
        %653 = vmatprep.mubr.bf16.mxu0 0
        %654 = vmatmul.mubr.bf16.gmra.mxu0 %v615
        %v655 = vpop.f32.mrf.mxu0
        %v656 = vadd.f32 0.0, %v655
        %v657 = vpop.f32.mrf.mxu0
        %v658 = vpop.f32.mrf.mxu0
        %v659 = vpop.f32.mrf.mxu0
        %660 = vdwg.mxu0
        %v661 = vpack.c.bf16 %v656, %v656
        %s662 = scalar_lea.vmem [#allocation10], 48
        %v663 = vld [vmem:[%s662] sm:$0xf]
        %v664 = vld [vmem:[#allocation2] sm:$0xf]
        %666 = vrot.lane.b32.xlu0 %v552, 120
        %v667 = vpop.permute.xlu0 %666
        %v669 = vunpack.c.l.b16 %v664
        %v670 = vpack.c.b16 %v669, %v669
        %671 = vrot.lane.b32.xlu0 %v670, 120
        %v672 = vpop.permute.xlu0 %671
        %v674 = vsel %vm554, %v667, 0
        %v677 = vsel %vm554, %v672, 0
        %679 = vmatprep.subr.bf16.mxu0 0
        %680 = vmatpush1.bf16.xpose.msra.mxu0 0
        %681 = vmatprep.subr.bf16.mxu0 0
        %682 = vmatpush1.bf16.xpose.msra.mxu0 0
        %683 = vmatprep.subr.bf16.mxu0 0
        %684 = vmatpush1.bf16.xpose.msra.mxu0 0
        %685 = vmatprep.subr.bf16.mxu0 0
        %686 = vmatpush1.bf16.xpose.msra.mxu0 0
        %687 = vmatprep.subr.bf16.mxu0 0
        %688 = vmatpush1.bf16.xpose.msra.mxu0 0
        %689 = vmatprep.subr.bf16.mxu0 0
        %690 = vmatpush1.bf16.xpose.msra.mxu0 0
        %691 = vmatprep.subr.bf16.mxu0 0
        %692 = vmatpush1.bf16.xpose.msra.mxu0 0
        %693 = vmatprep.subr.bf16.mxu0 0
        %694 = vmatpush1.bf16.xpose.msra.mxu0 %v677
        %695 = vmatprep.subr.bf16.mxu0 0
        %696 = vmatpush2.bf16.xpose.msra.mxu0 0
        %697 = vmatprep.subr.bf16.mxu0 0
        %698 = vmatpush2.bf16.xpose.msra.mxu0 0
        %699 = vmatprep.subr.bf16.mxu0 0
        %700 = vmatpush2.bf16.xpose.msra.mxu0 0
        %701 = vmatprep.subr.bf16.mxu0 0
        %702 = vmatpush2.bf16.xpose.msra.mxu0 0
        %703 = vmatprep.subr.bf16.mxu0 0
        %704 = vmatpush2.bf16.xpose.msra.mxu0 0
        %705 = vmatprep.subr.bf16.mxu0 0
        %706 = vmatpush2.bf16.xpose.msra.mxu0 0
        %707 = vmatprep.subr.bf16.mxu0 0
        %708 = vmatpush2.bf16.xpose.msra.mxu0 0
        %709 = vmatprep.subr.bf16.mxu0 0
        %710 = vmatpush2.bf16.xpose.msra.mxu0 0
        %711 = vmatprep.mubr.bf16.mxu0 0
        %712 = vmatmul.mubr.bf16.gmra.mxu0 %v674
        %v713 = vpop.f32.mrf.mxu0
        %v714 = vadd.f32 0.0, %v713
        %v715 = vpop.f32.mrf.mxu0
        %v716 = vpop.f32.mrf.mxu0
        %v717 = vpop.f32.mrf.mxu0
        %718 = vdwg.mxu0
        %v719 = vsel %vm554, %v714, -inf
        %720 = vmax.xlane.f32.xlu0 %v719
        %v721 = vpop.xlane.xlu0 %720
        %v722 = vsub.f32 %v714, %v721
        %v723 = vmul.f32 %v722, 1.442695
        %v724 = vpow.pop %v723
        %v725 = vsel %vm554, %v724, 0.0
        %726 = vadd.xlane.f32.xlu0 %v725
        %v727 = vpop.xlane.xlu0 %726
        %v728 = vrcp.pop %v727
        %v729 = vmul.f32 %v724, %v728
        %v730 = vpack.c.bf16 %v729, %v729
        %v731 = vld [vmem:[#allocation3] sm:$0xf]
        %v733 = vunpack.c.l.b16 %v731
        %v734 = vpack.c.b16 %v733, %v733
        %735 = vrot.lane.b32.xlu0 %v734, 120
        %v736 = vpop.permute.xlu0 %735
        %v738 = vsel %vm554, %v730, 0
        %v741 = vsel %vm617, %v736, 0
        %743 = vmatprep.subr.bf16.mxu0 0
        %744 = vmatpush1.bf16.msra.mxu0 0
        %745 = vmatprep.subr.bf16.mxu0 0
        %746 = vmatpush1.bf16.msra.mxu0 0
        %747 = vmatprep.subr.bf16.mxu0 0
        %748 = vmatpush1.bf16.msra.mxu0 0
        %749 = vmatprep.subr.bf16.mxu0 0
        %750 = vmatpush1.bf16.msra.mxu0 0
        %751 = vmatprep.subr.bf16.mxu0 0
        %752 = vmatpush1.bf16.msra.mxu0 0
        %753 = vmatprep.subr.bf16.mxu0 0
        %754 = vmatpush1.bf16.msra.mxu0 0
        %755 = vmatprep.subr.bf16.mxu0 0
        %756 = vmatpush1.bf16.msra.mxu0 0
        %757 = vmatprep.subr.bf16.mxu0 0
        %758 = vmatpush1.bf16.msra.mxu0 %v741
        %759 = vmatprep.subr.bf16.mxu0 0
        %760 = vmatpush2.bf16.msra.mxu0 0
        %761 = vmatprep.subr.bf16.mxu0 0
        %762 = vmatpush2.bf16.msra.mxu0 0
        %763 = vmatprep.subr.bf16.mxu0 0
        %764 = vmatpush2.bf16.msra.mxu0 0
        %765 = vmatprep.subr.bf16.mxu0 0
        %766 = vmatpush2.bf16.msra.mxu0 0
        %767 = vmatprep.subr.bf16.mxu0 0
        %768 = vmatpush2.bf16.msra.mxu0 0
        %769 = vmatprep.subr.bf16.mxu0 0
        %770 = vmatpush2.bf16.msra.mxu0 0
        %771 = vmatprep.subr.bf16.mxu0 0
        %772 = vmatpush2.bf16.msra.mxu0 0
        %773 = vmatprep.subr.bf16.mxu0 0
        %774 = vmatpush2.bf16.msra.mxu0 0
        %775 = vmatprep.mubr.bf16.mxu0 0
        %776 = vmatmul.mubr.bf16.gmra.mxu0 %v738
        %v777 = vpop.f32.mrf.mxu0
        %v778 = vadd.f32 0.0, %v777
        %v779 = vpop.f32.mrf.mxu0
        %v780 = vpop.f32.mrf.mxu0
        %v781 = vpop.f32.mrf.mxu0
        %782 = vdwg.mxu0
        %v783 = vpack.c.bf16 %v778, %v778
        %v784 = vld [vmem:[%s662 + $0x4] sm:$0xf]
        %v786 = vsel %vm554, %v783, 0
        %v789 = vsel %vm617, %v784, 0
        %791 = vmatprep.subr.bf16.mxu0 0
        %792 = vmatpush1.bf16.msra.mxu0 0
        %793 = vmatprep.subr.bf16.mxu0 0
        %794 = vmatpush1.bf16.msra.mxu0 0
        %795 = vmatprep.subr.bf16.mxu0 0
        %796 = vmatpush1.bf16.msra.mxu0 0
        %797 = vmatprep.subr.bf16.mxu0 0
        %798 = vmatpush1.bf16.msra.mxu0 0
        %799 = vmatprep.subr.bf16.mxu0 0
        %800 = vmatpush1.bf16.msra.mxu0 0
        %801 = vmatprep.subr.bf16.mxu0 0
        %802 = vmatpush1.bf16.msra.mxu0 0
        %803 = vmatprep.subr.bf16.mxu0 0
        %804 = vmatpush1.bf16.msra.mxu0 0
        %805 = vmatprep.subr.bf16.mxu0 0
        %806 = vmatpush1.bf16.msra.mxu0 %v789
        %807 = vmatprep.subr.bf16.mxu0 0
        %808 = vmatpush2.bf16.msra.mxu0 0
        %809 = vmatprep.subr.bf16.mxu0 0
        %810 = vmatpush2.bf16.msra.mxu0 0
        %811 = vmatprep.subr.bf16.mxu0 0
        %812 = vmatpush2.bf16.msra.mxu0 0
        %813 = vmatprep.subr.bf16.mxu0 0
        %814 = vmatpush2.bf16.msra.mxu0 0
        %815 = vmatprep.subr.bf16.mxu0 0
        %816 = vmatpush2.bf16.msra.mxu0 0
        %817 = vmatprep.subr.bf16.mxu0 0
        %818 = vmatpush2.bf16.msra.mxu0 0
        %819 = vmatprep.subr.bf16.mxu0 0
        %820 = vmatpush2.bf16.msra.mxu0 0
        %821 = vmatprep.subr.bf16.mxu0 0
        %822 = vmatpush2.bf16.msra.mxu0 0
        %823 = vmatprep.mubr.bf16.mxu0 0
        %824 = vmatmul.mubr.bf16.gmra.mxu0 %v786
        %v825 = vpop.f32.mrf.mxu0
        %v826 = vadd.f32 0.0, %v825
        %v827 = vpop.f32.mrf.mxu0
        %v828 = vpop.f32.mrf.mxu0
        %v829 = vpop.f32.mrf.mxu0
        %830 = vdwg.mxu0
        %v832 = vsel %vm554, %v661, 0
        %v835 = vsel %vm617, %v663, 0
        %837 = vmatprep.subr.bf16.mxu0 0
        %838 = vmatpush1.bf16.msra.mxu0 0
        %839 = vmatprep.subr.bf16.mxu0 0
        %840 = vmatpush1.bf16.msra.mxu0 0
        %841 = vmatprep.subr.bf16.mxu0 0
        %842 = vmatpush1.bf16.msra.mxu0 0
        %843 = vmatprep.subr.bf16.mxu0 0
        %844 = vmatpush1.bf16.msra.mxu0 0
        %845 = vmatprep.subr.bf16.mxu0 0
        %846 = vmatpush1.bf16.msra.mxu0 0
        %847 = vmatprep.subr.bf16.mxu0 0
        %848 = vmatpush1.bf16.msra.mxu0 0
        %849 = vmatprep.subr.bf16.mxu0 0
        %850 = vmatpush1.bf16.msra.mxu0 0
        %851 = vmatprep.subr.bf16.mxu0 0
        %852 = vmatpush1.bf16.msra.mxu0 %v835
        %853 = vmatprep.subr.bf16.mxu0 0
        %854 = vmatpush2.bf16.msra.mxu0 0
        %855 = vmatprep.subr.bf16.mxu0 0
        %856 = vmatpush2.bf16.msra.mxu0 0
        %857 = vmatprep.subr.bf16.mxu0 0
        %858 = vmatpush2.bf16.msra.mxu0 0
        %859 = vmatprep.subr.bf16.mxu0 0
        %860 = vmatpush2.bf16.msra.mxu0 0
        %861 = vmatprep.subr.bf16.mxu0 0
        %862 = vmatpush2.bf16.msra.mxu0 0
        %863 = vmatprep.subr.bf16.mxu0 0
        %864 = vmatpush2.bf16.msra.mxu0 0
        %865 = vmatprep.subr.bf16.mxu0 0
        %866 = vmatpush2.bf16.msra.mxu0 0
        %867 = vmatprep.subr.bf16.mxu0 0
        %868 = vmatpush2.bf16.msra.mxu0 0
        %869 = vmatprep.mubr.bf16.mxu0 0
        %870 = vmatmul.mubr.bf16.gmra.mxu0 %v832
        %v871 = vpop.f32.mrf.mxu0
        %v872 = vadd.f32 %v826, %v871
        %v873 = vpop.f32.mrf.mxu0
        %v874 = vpop.f32.mrf.mxu0
        %v875 = vpop.f32.mrf.mxu0
        %876 = vdwg.mxu0
        %v877 = vld [vmem:[#allocation2] sm:$0xf]
        %878 = vrot.lane.b32.xlu0 %v552, 112
        %v879 = vpop.permute.xlu0 %878
        %v881 = vunpack.c.l.b16 %v877
        %v882 = vpack.c.b16 %v881, %v881
        %883 = vrot.lane.b32.xlu0 %v882, 112
        %v884 = vpop.permute.xlu0 %883
        %v886 = vsel %vm554, %v879, 0
        %v889 = vsel %vm554, %v884, 0
        %891 = vmatprep.subr.bf16.mxu0 0
        %892 = vmatpush1.bf16.xpose.msra.mxu0 0
        %893 = vmatprep.subr.bf16.mxu0 0
        %894 = vmatpush1.bf16.xpose.msra.mxu0 0
        %895 = vmatprep.subr.bf16.mxu0 0
        %896 = vmatpush1.bf16.xpose.msra.mxu0 0
        %897 = vmatprep.subr.bf16.mxu0 0
        %898 = vmatpush1.bf16.xpose.msra.mxu0 0
        %899 = vmatprep.subr.bf16.mxu0 0
        %900 = vmatpush1.bf16.xpose.msra.mxu0 0
        %901 = vmatprep.subr.bf16.mxu0 0
        %902 = vmatpush1.bf16.xpose.msra.mxu0 0
        %903 = vmatprep.subr.bf16.mxu0 0
        %904 = vmatpush1.bf16.xpose.msra.mxu0 0
        %905 = vmatprep.subr.bf16.mxu0 0
        %906 = vmatpush1.bf16.xpose.msra.mxu0 %v889
        %907 = vmatprep.subr.bf16.mxu0 0
        %908 = vmatpush2.bf16.xpose.msra.mxu0 0
        %909 = vmatprep.subr.bf16.mxu0 0
        %910 = vmatpush2.bf16.xpose.msra.mxu0 0
        %911 = vmatprep.subr.bf16.mxu0 0
        %912 = vmatpush2.bf16.xpose.msra.mxu0 0
        %913 = vmatprep.subr.bf16.mxu0 0
        %914 = vmatpush2.bf16.xpose.msra.mxu0 0
        %915 = vmatprep.subr.bf16.mxu0 0
        %916 = vmatpush2.bf16.xpose.msra.mxu0 0
        %917 = vmatprep.subr.bf16.mxu0 0
        %918 = vmatpush2.bf16.xpose.msra.mxu0 0
        %919 = vmatprep.subr.bf16.mxu0 0
        %920 = vmatpush2.bf16.xpose.msra.mxu0 0
        %921 = vmatprep.subr.bf16.mxu0 0
        %922 = vmatpush2.bf16.xpose.msra.mxu0 0
        %923 = vmatprep.mubr.bf16.mxu0 0
        %924 = vmatmul.mubr.bf16.gmra.mxu0 %v886
        %v925 = vpop.f32.mrf.mxu0
        %v926 = vadd.f32 0.0, %v925
        %v927 = vpop.f32.mrf.mxu0
        %v928 = vpop.f32.mrf.mxu0
        %v929 = vpop.f32.mrf.mxu0
        %930 = vdwg.mxu0
        %v931 = vsel %vm554, %v926, -inf
        %932 = vmax.xlane.f32.xlu0 %v931
        %v933 = vpop.xlane.xlu0 %932
        %v934 = vsub.f32 %v926, %v933
        %v935 = vmul.f32 %v934, 1.442695
        %v936 = vpow.pop %v935
        %v937 = vsel %vm554, %v936, 0.0
        %938 = vadd.xlane.f32.xlu0 %v937
        %v939 = vpop.xlane.xlu0 %938
        %v940 = vrcp.pop %v939
        %v941 = vmul.f32 %v936, %v940
        %v942 = vpack.c.bf16 %v941, %v941
        %v943 = vld [vmem:[#allocation3] sm:$0xf]
        %v945 = vunpack.c.l.b16 %v943
        %v946 = vpack.c.b16 %v945, %v945
        %947 = vrot.lane.b32.xlu0 %v946, 112
        %v948 = vpop.permute.xlu0 %947
        %v950 = vsel %vm554, %v942, 0
        %v953 = vsel %vm617, %v948, 0
        %955 = vmatprep.subr.bf16.mxu0 0
        %956 = vmatpush1.bf16.msra.mxu0 0
        %957 = vmatprep.subr.bf16.mxu0 0
        %958 = vmatpush1.bf16.msra.mxu0 0
        %959 = vmatprep.subr.bf16.mxu0 0
        %960 = vmatpush1.bf16.msra.mxu0 0
        %961 = vmatprep.subr.bf16.mxu0 0
        %962 = vmatpush1.bf16.msra.mxu0 0
        %963 = vmatprep.subr.bf16.mxu0 0
        %964 = vmatpush1.bf16.msra.mxu0 0
        %965 = vmatprep.subr.bf16.mxu0 0
        %966 = vmatpush1.bf16.msra.mxu0 0
        %967 = vmatprep.subr.bf16.mxu0 0
        %968 = vmatpush1.bf16.msra.mxu0 0
        %969 = vmatprep.subr.bf16.mxu0 0
        %970 = vmatpush1.bf16.msra.mxu0 %v953
        %971 = vmatprep.subr.bf16.mxu0 0
        %972 = vmatpush2.bf16.msra.mxu0 0
        %973 = vmatprep.subr.bf16.mxu0 0
        %974 = vmatpush2.bf16.msra.mxu0 0
        %975 = vmatprep.subr.bf16.mxu0 0
        %976 = vmatpush2.bf16.msra.mxu0 0
        %977 = vmatprep.subr.bf16.mxu0 0
        %978 = vmatpush2.bf16.msra.mxu0 0
        %979 = vmatprep.subr.bf16.mxu0 0
        %980 = vmatpush2.bf16.msra.mxu0 0
        %981 = vmatprep.subr.bf16.mxu0 0
        %982 = vmatpush2.bf16.msra.mxu0 0
        %983 = vmatprep.subr.bf16.mxu0 0
        %984 = vmatpush2.bf16.msra.mxu0 0
        %985 = vmatprep.subr.bf16.mxu0 0
        %986 = vmatpush2.bf16.msra.mxu0 0
        %987 = vmatprep.mubr.bf16.mxu0 0
        %988 = vmatmul.mubr.bf16.gmra.mxu0 %v950
        %v989 = vpop.f32.mrf.mxu0
        %v990 = vadd.f32 0.0, %v989
        %v991 = vpop.f32.mrf.mxu0
        %v992 = vpop.f32.mrf.mxu0
        %v993 = vpop.f32.mrf.mxu0
        %994 = vdwg.mxu0
        %v995 = vpack.c.bf16 %v990, %v990
        %v996 = vld [vmem:[%s662 + $0x8] sm:$0xf]
        %v998 = vsel %vm554, %v995, 0
        %v1001 = vsel %vm617, %v996, 0
        %1003 = vmatprep.subr.bf16.mxu0 0
        %1004 = vmatpush1.bf16.msra.mxu0 0
        %1005 = vmatprep.subr.bf16.mxu0 0
        %1006 = vmatpush1.bf16.msra.mxu0 0
        %1007 = vmatprep.subr.bf16.mxu0 0
        %1008 = vmatpush1.bf16.msra.mxu0 0
        %1009 = vmatprep.subr.bf16.mxu0 0
        %1010 = vmatpush1.bf16.msra.mxu0 0
        %1011 = vmatprep.subr.bf16.mxu0 0
        %1012 = vmatpush1.bf16.msra.mxu0 0
        %1013 = vmatprep.subr.bf16.mxu0 0
        %1014 = vmatpush1.bf16.msra.mxu0 0
        %1015 = vmatprep.subr.bf16.mxu0 0
        %1016 = vmatpush1.bf16.msra.mxu0 0
        %1017 = vmatprep.subr.bf16.mxu0 0
        %1018 = vmatpush1.bf16.msra.mxu0 %v1001
        %1019 = vmatprep.subr.bf16.mxu0 0
        %1020 = vmatpush2.bf16.msra.mxu0 0
        %1021 = vmatprep.subr.bf16.mxu0 0
        %1022 = vmatpush2.bf16.msra.mxu0 0
        %1023 = vmatprep.subr.bf16.mxu0 0
        %1024 = vmatpush2.bf16.msra.mxu0 0
        %1025 = vmatprep.subr.bf16.mxu0 0
        %1026 = vmatpush2.bf16.msra.mxu0 0
        %1027 = vmatprep.subr.bf16.mxu0 0
        %1028 = vmatpush2.bf16.msra.mxu0 0
        %1029 = vmatprep.subr.bf16.mxu0 0
        %1030 = vmatpush2.bf16.msra.mxu0 0
        %1031 = vmatprep.subr.bf16.mxu0 0
        %1032 = vmatpush2.bf16.msra.mxu0 0
        %1033 = vmatprep.subr.bf16.mxu0 0
        %1034 = vmatpush2.bf16.msra.mxu0 0
        %1035 = vmatprep.mubr.bf16.mxu0 0
        %1036 = vmatmul.mubr.bf16.gmra.mxu0 %v998
        %v1037 = vpop.f32.mrf.mxu0
        %v1038 = vadd.f32 0.0, %v1037
        %v1039 = vpop.f32.mrf.mxu0
        %v1040 = vpop.f32.mrf.mxu0
        %v1041 = vpop.f32.mrf.mxu0
        %1042 = vdwg.mxu0
        %v1043 = vadd.f32 %v872, %v1038
        %v1044 = vld [vmem:[#allocation2] sm:$0xf]
        %1045 = vrot.lane.b32.xlu0 %v552, 104
        %v1046 = vpop.permute.xlu0 %1045
        %v1048 = vunpack.c.l.b16 %v1044
        %v1049 = vpack.c.b16 %v1048, %v1048
        %1050 = vrot.lane.b32.xlu0 %v1049, 104
        %v1051 = vpop.permute.xlu0 %1050
        %v1053 = vsel %vm554, %v1046, 0
        %v1056 = vsel %vm554, %v1051, 0
        %1058 = vmatprep.subr.bf16.mxu0 0
        %1059 = vmatpush1.bf16.xpose.msra.mxu0 0
        %1060 = vmatprep.subr.bf16.mxu0 0
        %1061 = vmatpush1.bf16.xpose.msra.mxu0 0
        %1062 = vmatprep.subr.bf16.mxu0 0
        %1063 = vmatpush1.bf16.xpose.msra.mxu0 0
        %1064 = vmatprep.subr.bf16.mxu0 0
        %1065 = vmatpush1.bf16.xpose.msra.mxu0 0
        %1066 = vmatprep.subr.bf16.mxu0 0
        %1067 = vmatpush1.bf16.xpose.msra.mxu0 0
        %1068 = vmatprep.subr.bf16.mxu0 0
        %1069 = vmatpush1.bf16.xpose.msra.mxu0 0
        %1070 = vmatprep.subr.bf16.mxu0 0
        %1071 = vmatpush1.bf16.xpose.msra.mxu0 0
        %1072 = vmatprep.subr.bf16.mxu0 0
        %1073 = vmatpush1.bf16.xpose.msra.mxu0 %v1056
        %1074 = vmatprep.subr.bf16.mxu0 0
        %1075 = vmatpush2.bf16.xpose.msra.mxu0 0
        %1076 = vmatprep.subr.bf16.mxu0 0
        %1077 = vmatpush2.bf16.xpose.msra.mxu0 0
        %1078 = vmatprep.subr.bf16.mxu0 0
        %1079 = vmatpush2.bf16.xpose.msra.mxu0 0
        %1080 = vmatprep.subr.bf16.mxu0 0
        %1081 = vmatpush2.bf16.xpose.msra.mxu0 0
        %1082 = vmatprep.subr.bf16.mxu0 0
        %1083 = vmatpush2.bf16.xpose.msra.mxu0 0
        %1084 = vmatprep.subr.bf16.mxu0 0
        %1085 = vmatpush2.bf16.xpose.msra.mxu0 0
        %1086 = vmatprep.subr.bf16.mxu0 0
        %1087 = vmatpush2.bf16.xpose.msra.mxu0 0
        %1088 = vmatprep.subr.bf16.mxu0 0
        %1089 = vmatpush2.bf16.xpose.msra.mxu0 0
        %1090 = vmatprep.mubr.bf16.mxu0 0
        %1091 = vmatmul.mubr.bf16.gmra.mxu0 %v1053
        %v1092 = vpop.f32.mrf.mxu0
        %v1093 = vadd.f32 0.0, %v1092
        %v1094 = vpop.f32.mrf.mxu0
        %v1095 = vpop.f32.mrf.mxu0
        %v1096 = vpop.f32.mrf.mxu0
        %1097 = vdwg.mxu0
        %v1098 = vsel %vm554, %v1093, -inf
        %1099 = vmax.xlane.f32.xlu0 %v1098
        %v1100 = vpop.xlane.xlu0 %1099
        %v1101 = vsub.f32 %v1093, %v1100
        %v1102 = vmul.f32 %v1101, 1.442695
        %v1103 = vpow.pop %v1102
        %v1104 = vsel %vm554, %v1103, 0.0
        %1105 = vadd.xlane.f32.xlu0 %v1104
        %v1106 = vpop.xlane.xlu0 %1105
        %v1107 = vrcp.pop %v1106
        %v1108 = vmul.f32 %v1103, %v1107
        %v1109 = vpack.c.bf16 %v1108, %v1108
        %v1110 = vld [vmem:[#allocation3] sm:$0xf]
        %v1112 = vunpack.c.l.b16 %v1110
        %v1113 = vpack.c.b16 %v1112, %v1112
        %1114 = vrot.lane.b32.xlu0 %v1113, 104
        %v1115 = vpop.permute.xlu0 %1114
        %v1117 = vsel %vm554, %v1109, 0
        %v1120 = vsel %vm617, %v1115, 0
        %1122 = vmatprep.subr.bf16.mxu0 0
        %1123 = vmatpush1.bf16.msra.mxu0 0
        %1124 = vmatprep.subr.bf16.mxu0 0
        %1125 = vmatpush1.bf16.msra.mxu0 0
        %1126 = vmatprep.subr.bf16.mxu0 0
        %1127 = vmatpush1.bf16.msra.mxu0 0
        %1128 = vmatprep.subr.bf16.mxu0 0
        %1129 = vmatpush1.bf16.msra.mxu0 0
        %1130 = vmatprep.subr.bf16.mxu0 0
        %1131 = vmatpush1.bf16.msra.mxu0 0
        %1132 = vmatprep.subr.bf16.mxu0 0
        %1133 = vmatpush1.bf16.msra.mxu0 0
        %1134 = vmatprep.subr.bf16.mxu0 0
        %1135 = vmatpush1.bf16.msra.mxu0 0
        %1136 = vmatprep.subr.bf16.mxu0 0
        %1137 = vmatpush1.bf16.msra.mxu0 %v1120
        %1138 = vmatprep.subr.bf16.mxu0 0
        %1139 = vmatpush2.bf16.msra.mxu0 0
        %1140 = vmatprep.subr.bf16.mxu0 0
        %1141 = vmatpush2.bf16.msra.mxu0 0
        %1142 = vmatprep.subr.bf16.mxu0 0
        %1143 = vmatpush2.bf16.msra.mxu0 0
        %1144 = vmatprep.subr.bf16.mxu0 0
        %1145 = vmatpush2.bf16.msra.mxu0 0
        %1146 = vmatprep.subr.bf16.mxu0 0
        %1147 = vmatpush2.bf16.msra.mxu0 0
        %1148 = vmatprep.subr.bf16.mxu0 0
        %1149 = vmatpush2.bf16.msra.mxu0 0
        %1150 = vmatprep.subr.bf16.mxu0 0
        %1151 = vmatpush2.bf16.msra.mxu0 0
        %1152 = vmatprep.subr.bf16.mxu0 0
        %1153 = vmatpush2.bf16.msra.mxu0 0
        %1154 = vmatprep.mubr.bf16.mxu0 0
        %1155 = vmatmul.mubr.bf16.gmra.mxu0 %v1117
        %v1156 = vpop.f32.mrf.mxu0
        %v1157 = vadd.f32 0.0, %v1156
        %v1158 = vpop.f32.mrf.mxu0
        %v1159 = vpop.f32.mrf.mxu0
        %v1160 = vpop.f32.mrf.mxu0
        %1161 = vdwg.mxu0
        %v1162 = vpack.c.bf16 %v1157, %v1157
        %v1163 = vld [vmem:[%s662 + $0xc] sm:$0xf]
        %v1165 = vsel %vm554, %v1162, 0
        %v1168 = vsel %vm617, %v1163, 0
        %1170 = vmatprep.subr.bf16.mxu0 0
        %1171 = vmatpush1.bf16.msra.mxu0 0
        %1172 = vmatprep.subr.bf16.mxu0 0
        %1173 = vmatpush1.bf16.msra.mxu0 0
        %1174 = vmatprep.subr.bf16.mxu0 0
        %1175 = vmatpush1.bf16.msra.mxu0 0
        %1176 = vmatprep.subr.bf16.mxu0 0
        %1177 = vmatpush1.bf16.msra.mxu0 0
        %1178 = vmatprep.subr.bf16.mxu0 0
        %1179 = vmatpush1.bf16.msra.mxu0 0
        %1180 = vmatprep.subr.bf16.mxu0 0
        %1181 = vmatpush1.bf16.msra.mxu0 0
        %1182 = vmatprep.subr.bf16.mxu0 0
        %1183 = vmatpush1.bf16.msra.mxu0 0
        %1184 = vmatprep.subr.bf16.mxu0 0
        %1185 = vmatpush1.bf16.msra.mxu0 %v1168
        %1186 = vmatprep.subr.bf16.mxu0 0
        %1187 = vmatpush2.bf16.msra.mxu0 0
        %1188 = vmatprep.subr.bf16.mxu0 0
        %1189 = vmatpush2.bf16.msra.mxu0 0
        %1190 = vmatprep.subr.bf16.mxu0 0
        %1191 = vmatpush2.bf16.msra.mxu0 0
        %1192 = vmatprep.subr.bf16.mxu0 0
        %1193 = vmatpush2.bf16.msra.mxu0 0
        %1194 = vmatprep.subr.bf16.mxu0 0
        %1195 = vmatpush2.bf16.msra.mxu0 0
        %1196 = vmatprep.subr.bf16.mxu0 0
        %1197 = vmatpush2.bf16.msra.mxu0 0
        %1198 = vmatprep.subr.bf16.mxu0 0
        %1199 = vmatpush2.bf16.msra.mxu0 0
        %1200 = vmatprep.subr.bf16.mxu0 0
        %1201 = vmatpush2.bf16.msra.mxu0 0
        %1202 = vmatprep.mubr.bf16.mxu0 0
        %1203 = vmatmul.mubr.bf16.gmra.mxu0 %v1165
        %v1204 = vpop.f32.mrf.mxu0
        %v1205 = vadd.f32 0.0, %v1204
        %v1206 = vpop.f32.mrf.mxu0
        %v1207 = vpop.f32.mrf.mxu0
        %v1208 = vpop.f32.mrf.mxu0
        %1209 = vdwg.mxu0
        %v1210 = vadd.f32 %v1043, %v1205
        %v1211 = vld [vmem:[%s4 + $0x3] sm:$0x1]
        %v1212 = vlaneseq
        %v1213 = vshrl.u32 %v1212, 7
        %v1214 = vsub.s32 0, %v1213
        %v1215 = vrot.slane %v1211, %v1214
        %v1216 = vadd.f32 %v1210, %v1215
        %1217 = vst.msk [vmem:[%s342] sm:$0xff] %vm508, %v1216
        %s1218 = sand.u32 %s170, 1
        %s1219 = scalar_lea.sflag [#allocation6], %s1218
        %s1220 = sand.u32 %s170, 1
        %s1221 = smul.addr %s1220, 8
        %s1222 = scalar_lea.vmem [#allocation12], %s1221
        // Predicated region
        $region61: #{tpu_custom_call.1} parent=39 // pred_check
          %p1223 = pneg %p180
        $region62: #{tpu_custom_call.1} parent=39 // pred_check_branch
          %1225 = sbr.rel (%p1223) target = $region64
        $region63: #{tpu_custom_call.1} parent=39 // pred_region
          %s1227 = ssub.s32 128, 128
          %1228 = vsyncadd %s1219, %s1227
          %s1229 = sadd.s32 %s31, %s30
          %s1230 = smul.addr %s1229, 128
          %s1231 = scalar_lea.hbm %s5, %s1230
          %s1233 = sshll.u32 %s1222, 4
          %s1234 = int_to_ptr.vmem [resolvable:$true] %s1233
          %1236 = dma.vmem_to_hbm [thread:$0]  %s1234, 128, %s1231, %s1219
        $region64: #{tpu_custom_call.1} parent=39 // pred_fallthru
          _
      $region40: #{tpu_custom_call.1} parent=5 // pred_fallthru
        _
      %p1237 = scmp.le.s32.totalorder 2, %s21
      // Predicated region
      $region65: #{tpu_custom_call.1} parent=5 // pred_check
        %p1238 = pneg %p1237
      $region66: #{tpu_custom_call.1} parent=5 // pred_check_branch
        %1240 = sbr.rel (%p1238) target = $region68
      $region67: #{tpu_custom_call.1} parent=5 // pred_region
        %s1241 = ssub.s32 %s21, 2
        // Predicated region
        $region69: #{tpu_custom_call.1} parent=67 // pred_check
          %p1242 = pneg %p186
        $region70: #{tpu_custom_call.1} parent=67 // pred_check_branch
          %1244 = sbr.rel (%p1242) target = $region72
        $region71: #{tpu_custom_call.1} parent=67 // pred_region
          %s1245 = sand.u32 %s171, 1
          %s1246 = scalar_lea.sflag [#allocation6], %s1245
          %s1247 = sand.u32 %s171, 1
          %s1248 = smul.addr %s1247, 8
          %s1249 = scalar_lea.vmem [#allocation12], %s1248
          %1250 = dma.done %s1246, 128
        $region72: #{tpu_custom_call.1} parent=67 // pred_fallthru
          _
      $region68: #{tpu_custom_call.1} parent=5 // pred_fallthru
        _
    $region6: #{tpu_custom_call.1} parent=1 // loop_footer
      %s25 = sadd.s32 1, %s21
    $region7: #{tpu_custom_call.1} parent=1 // loop_footer_branch
      %20 = sbr.rel target = $region3
    $region8: #{tpu_custom_call.1} parent=1 // loop_exit
      _
    %1251 = vsyncpa [#allocation5], 1
    %s1252 = scalar_lea.sflag [#allocation5], 1
    %1253 = vsyncpa %s1252, 1
    %1254 = vsyncpa [#allocation8], 1
    %s1255 = scalar_lea.sflag [#allocation8], 1
    %1256 = vsyncpa %s1255, 1
    %1257 = vsyncpa [#allocation11], 1
    %1258 = vsyncpa [#allocation6], 1
    %s1259 = scalar_lea.sflag [#allocation6], 1
    %1260 = vsyncpa %s1259, 1

</llo_original>
